<compile_context>
chip_gen: v7x
topology: tpu7x:2x2x1
jax: 0.10.0
libtpu: 0.0.40
codegen_flags: <defaults>
</compile_context>

<pallas_src>
import functools

import jax
import jax.numpy as jnp
from jax.experimental import pallas as pl
from jax.experimental.pallas import tpu as pltpu


def _round_up(x: int, m: int) -> int:
    return ((x + m - 1) // m) * m


def _fused_gcn_kernel(a_ref, dinv_ref, xw1_ref, b1_ref, w2_ref, b2_ref,
                      o_ref, hw2_ref, acc_ref, *,
                      row_block: int, k_block: int, hp: int, op: int):
    p = pl.program_id(0)          # 0: layer 1, 1: layer 2
    i = pl.program_id(1)          # destination-row tile
    k = pl.program_id(2)          # adjacency-column (source-row) tile
    nk = pl.num_programs(2)

    @pl.when(k == 0)
    def _init():
        acc_ref[...] = jnp.zeros_like(acc_ref)

    # 0/1 adjacency streamed as int8 (halves the dominant HBM term); the cast to bf16 is
    # exact for {0,1}, so the aggregation itself carries no quantization error.
    a_tile = a_ref[...].astype(jnp.float32).astype(jnp.bfloat16)
    k0 = pl.multiple_of(k * k_block, k_block)

    @pl.when(p == 0)
    def _layer1_accumulate():
        # acc += A[rows, k-slice] @ (X W1)[k-slice, :]
        acc_ref[:, :hp] += jnp.dot(a_tile, xw1_ref[pl.ds(k0, k_block), :],
                                   preferred_element_type=jnp.float32)

    @pl.when(p == 1)
    def _layer2_accumulate():
        # dropout(0.5) is identity in eval mode.
        # acc += A[rows, k-slice] @ (h W2)[k-slice, :]
        acc_ref[:, :op] += jnp.dot(a_tile, hw2_ref[pl.ds(k0, k_block), :],
                                   preferred_element_type=jnp.float32)

    @pl.when((p == 0) & (k == nk - 1))
    def _layer1_finalize():
        # Exact f32 right-normalisation (1/in-degree), bias, ReLU; fold W2 in immediately
        # so phase 1 is a single A @ (hW2) matmul per tile.
        h = jnp.maximum(acc_ref[:, :hp] * dinv_ref[...] + b1_ref[...], 0.0)
        hw2 = jnp.dot(h.astype(jnp.bfloat16), w2_ref[...],
                      preferred_element_type=jnp.float32)
        r0 = pl.multiple_of(i * row_block, row_block)
        hw2_ref[pl.ds(r0, row_block), :] = hw2.astype(hw2_ref.dtype)
        # No o_ref write here: every phase-0 step aliases output block 0 (see out_specs),
        # so no zero tiles are ever flushed to HBM.

    @pl.when((p == 1) & (k == nk - 1))
    def _layer2_finalize():
        o_ref[...] = (acc_ref[:, :op] * dinv_ref[...] + b2_ref[...]).astype(o_ref.dtype)


def jj_norm(h):
    # TODO(synk): JJ_Norm implementation unavailable; applied as identity.
    return h


def gcn_jj_forward(adj, features, params, *, row_block=256, k_block=1024):
    """Fused 2-layer GraphConv(norm='right') forward.

    adj:      [N, N] dense 0/1 adjacency, adj[dst, src] = 1 for an edge src -> dst.
    features: [N, in_size] f32
    params:   (w1 [in,hid], b1 [hid], w2 [hid,out], b2 [out]) f32
    Returns   [N, out_size] f32.
    """
    w1, b1, w2, b2 = params
    n = adj.shape[0]
    in_size, hid_size = w1.shape
    out_size = w2.shape[1]

    # ---- exact right-norm factorisation:  A_norm = diag(1/in_deg) @ A_binary ------------
    in_deg = jnp.maximum(adj.sum(axis=1), 1.0)                 # guard isolated nodes
    deg_inv = (1.0 / in_deg).astype(jnp.float32).reshape(-1, 1)

    # ---- hoist X @ W1 out of the tile loop (tiny [N,in] x [in,hid] matmul) ---------------
    xw1 = features.astype(jnp.float32) @ w1.astype(jnp.float32)

    # ---- lane-dense padding (feature dims -> multiples of 128) --------------------------
    hp = _round_up(hid_size, 128)
    op = _round_up(out_size, 128)
    n_pad0 = _round_up(n, 128)
    row_block = min(row_block, n_pad0)
    assert row_block % 128 == 0
    n_pad = _round_up(n_pad0, row_block)
    k_block = min(k_block, n_pad)
    while n_pad % k_block:
        k_block //= 2
    assert k_block % 128 == 0
    n_tiles = n_pad // row_block
    k_tiles = n_pad // k_block
    acc_w = max(hp, op)

    def pad2(a, r, c, dtype):
        buf = jnp.zeros((r, c), dtype)
        return buf.at[: a.shape[0], : a.shape[1]].set(a.astype(dtype))

    a_p = pad2(adj, n_pad, n_pad, jnp.int8)            # exact 0/1 adjacency, 1 B/elem
    dinv_p = pad2(deg_inv, n_pad, 1, jnp.float32)      # exact f32 row scale
    xw1_p = pad2(xw1, n_pad, hp, jnp.bfloat16)
    w2_p = pad2(w2, hp, op, jnp.bfloat16)
    b1_p = pad2(b1.reshape(1, -1), 1, hp, jnp.float32)
    b2_p = pad2(b2.reshape(1, -1), 1, op, jnp.float32)

    # ---- cost / VMEM accounting ----------------------------------------------------------
    flops = 2 * (n_pad * n_pad * hp + n_pad * hp * op + n_pad * n_pad * op)
    bytes_accessed = (2 * n_pad * n_pad * 1            # A streamed once per phase (int8)
                      + n_pad * hp * 2                 # X@W1
                      + hp * op * 2 + (hp + op) * 4    # W2, biases
                      + 2 * n_pad * 4                  # deg_inv (both phases)
                      + n_pad * op * 4)                # output written once

    def vmem_bytes(nbuf_invariant):
        return (2 * row_block * k_block * 1            # A tile, double-buffered (int8)
                + 2 * row_block * 4                    # deg_inv tile
                + nbuf_invariant * (n_pad * hp * 2 + hp * op * 2 + (hp + op) * 4)
                + 2 * row_block * op * 4               # output tile
                + n_pad * op * 2                       # hW2 scratch (persists across grid)
                + row_block * acc_w * 4)               # f32 K-axis accumulator

    try:
        vmem_cap = int(pltpu.get_tpu_info().vmem_capacity_bytes)
    except Exception:
        vmem_cap = 64 * 1024 * 1024                    # conservative (v7x per-TensorCore)

    kernel = functools.partial(_fused_gcn_kernel, row_block=row_block,
                               k_block=k_block, hp=hp, op=op)

    def build(single_buffer_invariants):
        def inv_spec(shape):
            imap = lambda p, i, k: (0, 0)
            if single_buffer_invariants:
                # Invariant operands never change block index; single-buffering halves
                # their VMEM footprint.
                return pl.BlockSpec(shape, imap, pipeline_mode=pl.Buffered(1))
            return pl.BlockSpec(shape, imap)

        nbuf = 1 if single_buffer_invariants else 2
        vmem_limit = int(min(max(2 * vmem_bytes(nbuf), 32 * 1024 * 1024),
                             int(0.85 * vmem_cap)))
        return pl.pallas_call(
            kernel,
            out_shape=jax.ShapeDtypeStruct((n_pad, op), jnp.float32),
            grid_spec=pltpu.PrefetchScalarGridSpec(
                num_scalar_prefetch=0,
                grid=(2, n_tiles, k_tiles),                        # (phase, row_tile, col_tile)
                in_specs=[
                    pl.BlockSpec((row_block, k_block), lambda p, i, k: (i, k)),  # A (int8)
                    pl.BlockSpec((row_block, 1), lambda p, i, k: (i, 0)),        # 1/in_deg
                    inv_spec((n_pad, hp)),                                       # X @ W1
                    inv_spec((1, hp)),                                           # b1
                    inv_spec((hp, op)),                                          # W2
                    inv_spec((1, op)),                                           # b2
                ],
                # Phase-0 steps all alias output block 0 (i*p == 0), so no dummy tiles are
                # flushed; phase 1 writes each row tile exactly once at its last K step.
                out_specs=pl.BlockSpec((row_block, op), lambda p, i, k: (i * p, 0)),
                scratch_shapes=[
                    pltpu.VMEM((n_pad, op), jnp.bfloat16),         # hW2 (persists p0 -> p1)
                    pltpu.VMEM((row_block, acc_w), jnp.float32),   # K-axis accumulator
                ],
            ),
            compiler_params=pltpu.CompilerParams(
                # Row axis must stay "arbitrary": phase-1 tiles read the shared hW2 scratch
                # written by every phase-0 tile (see TODO about the v7x two-call split).
                dimension_semantics=("arbitrary", "arbitrary", "arbitrary"),
                vmem_limit_bytes=vmem_limit,
            ),
            cost_estimate=pl.CostEstimate(flops=flops, transcendentals=0,
                                          bytes_accessed=bytes_accessed),
        )

    args = (a_p, dinv_p, xw1_p, b1_p, w2_p, b2_p)
    try:
        out_padded = build(single_buffer_invariants=True)(*args)
    except Exception:
        # Single-buffering of invariants is an optional VMEM optimisation; fall back to
        # default double-buffering if this JAX build rejects pipeline_mode here.
        out_padded = build(single_buffer_invariants=False)(*args)

    # JJ_Norm (identity); slice the lane-dense slab back to the logical shape.
    return jj_norm(out_padded[:n, :out_size])


def make_ring_adjacency(n):
    """Deterministic binary adjacency (dst, src): ring edges both directions + self loops."""
    idx = jnp.arange(n)
    adj = jnp.zeros((n, n), jnp.float32)
    adj = adj.at[idx, idx].set(1.0)                    # self loops
    adj = adj.at[idx, (idx + 1) % n].set(1.0)          # edge (i+1) -> i
    adj = adj.at[idx, (idx - 1) % n].set(1.0)          # edge (i-1) -> i
    return adj


if __name__ == "__main__":
    # Small shapes consistent with the module: N nodes, in_size -> hid_size -> out_size.
    N, in_size, hid_size, out_size = 64, 16, 32, 8

    key = jax.random.PRNGKey(0)
    k_feat, k_w1, k_w2 = jax.random.split(key, 3)

    features = jax.random.normal(k_feat, (N, in_size), dtype=jnp.float32)
    adj = make_ring_adjacency(N)

    # Deterministic Glorot-style init (matches dgl GraphConv parameter shapes).
    def glorot(k, shape):
        limit = (6.0 / (shape[0] + shape[1])) ** 0.5
        return jax.random.uniform(k, shape, jnp.float32, -limit, limit)

    w1 = glorot(k_w1, (in_size, hid_size))
    b1 = jnp.zeros((hid_size,), jnp.float32)
    w2 = glorot(k_w2, (hid_size, out_size))
    b2 = jnp.zeros((out_size,), jnp.float32)

    out = gcn_jj_forward(adj, features, (w1, b1, w2, b2))
    jax.block_until_ready(out)

    # Plain-JAX f32 reference of the same math.  The adjacency/normalisation path is now
    # exact in the kernel; only X@W1 and h@W2 pass through bf16 (f32 accumulation), hence
    # the relaxed tolerance.
    a_norm = adj / jnp.maximum(adj.sum(axis=1, keepdims=True), 1.0)
    ref = jnp.maximum(a_norm @ (features @ w1) + b1, 0.0)
    ref = a_norm @ (ref @ w2) + b2
    assert out.shape == (N, out_size)
    max_err = float(jnp.max(jnp.abs(out - ref)))
    assert max_err < 5e-2, f"max abs err {max_err}"

    print("KERNEL_OK")
</pallas_src>

<mosaic_0001>
module attributes {stable_mosaic.version = 11 : i64} {
  func.func @_fused_gcn_kernel(%arg0: i32, %arg1: i32, %arg2: i32, %arg3: memref<128x128xi8, #tpu.memory_space<vmem>>, %arg4: memref<128x1xf32, #tpu.memory_space<vmem>>, %arg5: memref<128x128xbf16, #tpu.memory_space<vmem>>, %arg6: memref<1x128xf32, #tpu.memory_space<vmem>>, %arg7: memref<128x128xbf16, #tpu.memory_space<vmem>>, %arg8: memref<1x128xf32, #tpu.memory_space<vmem>>, %arg9: memref<128x128xf32, #tpu.memory_space<vmem>>, %arg10: memref<128x128xbf16, #tpu.memory_space<vmem>>, %arg11: memref<128x128xf32, #tpu.memory_space<vmem>>) attributes {dimension_semantics = [#tpu.dimension_semantics<arbitrary>, #tpu.dimension_semantics<arbitrary>, #tpu.dimension_semantics<arbitrary>], iteration_bounds = array<i64: 2, 1, 1>, scalar_prefetch = 0 : i64, scratch_operands = 2 : i64, tpu.core_type = #tpu.core_type<tc>, window_params = [{transform_indices = @transform_0, window_bounds = array<i64: 128, 128>}, {transform_indices = @transform_1, window_bounds = array<i64: 128, 1>}, {pipeline_mode = #tpu.pipeline_mode<synchronous>, transform_indices = @transform_2, window_bounds = array<i64: 128, 128>}, {pipeline_mode = #tpu.pipeline_mode<synchronous>, transform_indices = @transform_3, window_bounds = array<i64: 1, 128>}, {pipeline_mode = #tpu.pipeline_mode<synchronous>, transform_indices = @transform_4, window_bounds = array<i64: 128, 128>}, {pipeline_mode = #tpu.pipeline_mode<synchronous>, transform_indices = @transform_5, window_bounds = array<i64: 1, 128>}, {transform_indices = @transform_6, window_bounds = array<i64: 128, 128>}]} {
    %c0_i32 = arith.constant 0 : i32
    %0 = arith.cmpi eq, %arg2, %c0_i32 : i32
    %1 = arith.extui %0 : i1 to i32
    %c0_i32_0 = arith.constant 0 : i32
    %2 = arith.cmpi ne, %1, %c0_i32_0 : i32
    scf.if %2 {
      %cst = arith.constant 0.000000e+00 : f32
      %24 = vector.broadcast %cst : f32 to vector<128x128xf32>
      %c0_11 = arith.constant 0 : index
      %c0_12 = arith.constant 0 : index
      %25 = vector.load %arg11[%c0_11, %c0_12] : memref<128x128xf32, #tpu.memory_space<vmem>>, vector<128x128xf32>
      tpu.vector_store %arg11[%c0_11, %c0_12], %24 {strides = array<i32>} : memref<128x128xf32, #tpu.memory_space<vmem>>, vector<128x128xf32>,
    } else {
    }
    %c0 = arith.constant 0 : index
    %c0_1 = arith.constant 0 : index
    %3 = vector.load %arg3[%c0, %c0_1] : memref<128x128xi8, #tpu.memory_space<vmem>>, vector<128x128xi8>
    %4 = arith.sitofp %3 : vector<128x128xi8> to vector<128x128xf32>
    %5 = arith.truncf %4 : vector<128x128xf32> to vector<128x128xbf16>
    %c128_i32 = arith.constant 128 : i32
    %6 = arith.muli %arg2, %c128_i32 : i32
    %7 = tpu.assume_multiple %6, 128 : i32
    %c0_i32_2 = arith.constant 0 : i32
    %8 = arith.cmpi eq, %arg0, %c0_i32_2 : i32
    %9 = arith.extui %8 : i1 to i32
    %c0_i32_3 = arith.constant 0 : i32
    %10 = arith.cmpi ne, %9, %c0_i32_3 : i32
    scf.if %10 {
      %c0_11 = arith.constant 0 : index
      %c0_12 = arith.constant 0 : index
      %24 = vector.load %arg11[%c0_11, %c0_12] : memref<128x128xf32, #tpu.memory_space<vmem>>, vector<128x128xf32>
      %25 = arith.index_cast %7 : i32 to index
      %c0_13 = arith.constant 0 : index
      %26 = vector.load %arg5[%25, %c0_13] : memref<128x128xbf16, #tpu.memory_space<vmem>>, vector<128x128xbf16>
      %cst = arith.constant dense<0.000000e+00> : vector<128x128xf32>
      %27 = tpu.matmul %5, %26, %cst {dimension_numbers = #tpu.dot_dimension_numbers<[1], [0], [0], [1], [0, 0, 1, 1], [], []>} : vector<128x128xbf16>, vector<128x128xbf16>, vector<128x128xf32> -> vector<128x128xf32>
      %28 = arith.addf %24, %27 : vector<128x128xf32>
      %c0_14 = arith.constant 0 : index
      %c0_15 = arith.constant 0 : index
      %29 = vector.load %arg11[%c0_14, %c0_15] : memref<128x128xf32, #tpu.memory_space<vmem>>, vector<128x128xf32>
      tpu.vector_store %arg11[%c0_14, %c0_15], %28 {strides = array<i32>} : memref<128x128xf32, #tpu.memory_space<vmem>>, vector<128x128xf32>,
    } else {
    }
    %c1_i32 = arith.constant 1 : i32
    %11 = arith.cmpi eq, %arg0, %c1_i32 : i32
    %12 = arith.extui %11 : i1 to i32
    %c0_i32_4 = arith.constant 0 : i32
    %13 = arith.cmpi ne, %12, %c0_i32_4 : i32
    scf.if %13 {
      %c0_11 = arith.constant 0 : index
      %c0_12 = arith.constant 0 : index
      %24 = vector.load %arg11[%c0_11, %c0_12] : memref<128x128xf32, #tpu.memory_space<vmem>>, vector<128x128xf32>
      %25 = arith.index_cast %7 : i32 to index
      %c0_13 = arith.constant 0 : index
      %26 = vector.load %arg10[%25, %c0_13] : memref<128x128xbf16, #tpu.memory_space<vmem>>, vector<128x128xbf16>
      %cst = arith.constant dense<0.000000e+00> : vector<128x128xf32>
      %27 = tpu.matmul %5, %26, %cst {dimension_numbers = #tpu.dot_dimension_numbers<[1], [0], [0], [1], [0, 0, 1, 1], [], []>} : vector<128x128xbf16>, vector<128x128xbf16>, vector<128x128xf32> -> vector<128x128xf32>
      %28 = arith.addf %24, %27 : vector<128x128xf32>
      %c0_14 = arith.constant 0 : index
      %c0_15 = arith.constant 0 : index
      %29 = vector.load %arg11[%c0_14, %c0_15] : memref<128x128xf32, #tpu.memory_space<vmem>>, vector<128x128xf32>
      tpu.vector_store %arg11[%c0_14, %c0_15], %28 {strides = array<i32>} : memref<128x128xf32, #tpu.memory_space<vmem>>, vector<128x128xf32>,
    } else {
    }
    %c0_i32_5 = arith.constant 0 : i32
    %14 = arith.cmpi eq, %arg0, %c0_i32_5 : i32
    %c0_i32_6 = arith.constant 0 : i32
    %15 = arith.cmpi eq, %arg2, %c0_i32_6 : i32
    %16 = arith.andi %14, %15 : i1
    %17 = arith.extui %16 : i1 to i32
    %c0_i32_7 = arith.constant 0 : i32
    %18 = arith.cmpi ne, %17, %c0_i32_7 : i32
    scf.if %18 {
      %c0_11 = arith.constant 0 : index
      %c0_12 = arith.constant 0 : index
      %24 = vector.load %arg11[%c0_11, %c0_12] : memref<128x128xf32, #tpu.memory_space<vmem>>, vector<128x128xf32>
      %c0_13 = arith.constant 0 : index
      %c0_14 = arith.constant 0 : index
      %25 = vector.load %arg4[%c0_13, %c0_14] : memref<128x1xf32, #tpu.memory_space<vmem>>, vector<128x1xf32>
      %26 = vector.broadcast %25 : vector<128x1xf32> to vector<128x128xf32>
      %27 = arith.mulf %24, %26 : vector<128x128xf32>
      %c0_15 = arith.constant 0 : index
      %c0_16 = arith.constant 0 : index
      %28 = vector.load %arg6[%c0_15, %c0_16] : memref<1x128xf32, #tpu.memory_space<vmem>>, vector<1x128xf32>
      %29 = vector.broadcast %28 : vector<1x128xf32> to vector<128x128xf32>
      %30 = arith.addf %27, %29 : vector<128x128xf32>
      %cst = arith.constant 0.000000e+00 : f32
      %31 = vector.broadcast %cst : f32 to vector<128x128xf32>
      %32 = arith.maximumf %30, %31 : vector<128x128xf32>
      %33 = arith.truncf %32 : vector<128x128xf32> to vector<128x128xbf16>
      %c0_17 = arith.constant 0 : index
      %c0_18 = arith.constant 0 : index
      %34 = vector.load %arg7[%c0_17, %c0_18] : memref<128x128xbf16, #tpu.memory_space<vmem>>, vector<128x128xbf16>
      %cst_19 = arith.constant dense<0.000000e+00> : vector<128x128xf32>
      %35 = tpu.matmul %33, %34, %cst_19 {dimension_numbers = #tpu.dot_dimension_numbers<[1], [0], [0], [1], [0, 0, 1, 1], [], []>} : vector<128x128xbf16>, vector<128x128xbf16>, vector<128x128xf32> -> vector<128x128xf32>
      %c128_i32_20 = arith.constant 128 : i32
      %36 = arith.muli %arg1, %c128_i32_20 : i32
      %37 = tpu.assume_multiple %36, 128 : i32
      %38 = arith.truncf %35 : vector<128x128xf32> to vector<128x128xbf16>
      %39 = arith.index_cast %37 : i32 to index
      %c0_21 = arith.constant 0 : index
      %40 = vector.load %arg10[%39, %c0_21] : memref<128x128xbf16, #tpu.memory_space<vmem>>, vector<128x128xbf16>
      tpu.vector_store %arg10[%39, %c0_21], %38 {strides = array<i32>} : memref<128x128xbf16, #tpu.memory_space<vmem>>, vector<128x128xbf16>,
    } else {
    }
    %c1_i32_8 = arith.constant 1 : i32
    %19 = arith.cmpi eq, %arg0, %c1_i32_8 : i32
    %c0_i32_9 = arith.constant 0 : i32
    %20 = arith.cmpi eq, %arg2, %c0_i32_9 : i32
    %21 = arith.andi %19, %20 : i1
    %22 = arith.extui %21 : i1 to i32
    %c0_i32_10 = arith.constant 0 : i32
    %23 = arith.cmpi ne, %22, %c0_i32_10 : i32
    scf.if %23 {
      %c0_11 = arith.constant 0 : index
      %c0_12 = arith.constant 0 : index
      %24 = vector.load %arg11[%c0_11, %c0_12] : memref<128x128xf32, #tpu.memory_space<vmem>>, vector<128x128xf32>
      %c0_13 = arith.constant 0 : index
      %c0_14 = arith.constant 0 : index
      %25 = vector.load %arg4[%c0_13, %c0_14] : memref<128x1xf32, #tpu.memory_space<vmem>>, vector<128x1xf32>
      %26 = vector.broadcast %25 : vector<128x1xf32> to vector<128x128xf32>
      %27 = arith.mulf %24, %26 : vector<128x128xf32>
      %c0_15 = arith.constant 0 : index
      %c0_16 = arith.constant 0 : index
      %28 = vector.load %arg8[%c0_15, %c0_16] : memref<1x128xf32, #tpu.memory_space<vmem>>, vector<1x128xf32>
      %29 = vector.broadcast %28 : vector<1x128xf32> to vector<128x128xf32>
      %30 = arith.addf %27, %29 : vector<128x128xf32>
      %c0_17 = arith.constant 0 : index
      %c0_18 = arith.constant 0 : index
      %31 = vector.load %arg9[%c0_17, %c0_18] : memref<128x128xf32, #tpu.memory_space<vmem>>, vector<128x128xf32>
      tpu.vector_store %arg9[%c0_17, %c0_18], %30 {strides = array<i32>} : memref<128x128xf32, #tpu.memory_space<vmem>>, vector<128x128xf32>,
    } else {
    }
    return
  }
  func.func @transform_0(%arg0: i32, %arg1: i32, %arg2: i32) -> (i32, i32) {
    %c0_i32 = arith.constant 0 : i32
    return %arg1, %arg2 : i32, i32
  }
  func.func @transform_1(%arg0: i32, %arg1: i32, %arg2: i32) -> (i32, i32) {
    %c0_i32 = arith.constant 0 : i32
    %c0_i32_0 = arith.constant 0 : i32
    return %arg1, %c0_i32 : i32, i32
  }
  func.func @transform_2(%arg0: i32, %arg1: i32, %arg2: i32) -> (i32, i32) {
    %c0_i32 = arith.constant 0 : i32
    %c0_i32_0 = arith.constant 0 : i32
    %c0_i32_1 = arith.constant 0 : i32
    return %c0_i32, %c0_i32_0 : i32, i32
  }
  func.func @transform_3(%arg0: i32, %arg1: i32, %arg2: i32) -> (i32, i32) {
    %c0_i32 = arith.constant 0 : i32
    %c0_i32_0 = arith.constant 0 : i32
    %c0_i32_1 = arith.constant 0 : i32
    return %c0_i32, %c0_i32_0 : i32, i32
  }
  func.func @transform_4(%arg0: i32, %arg1: i32, %arg2: i32) -> (i32, i32) {
    %c0_i32 = arith.constant 0 : i32
    %c0_i32_0 = arith.constant 0 : i32
    %c0_i32_1 = arith.constant 0 : i32
    return %c0_i32, %c0_i32_0 : i32, i32
  }
  func.func @transform_5(%arg0: i32, %arg1: i32, %arg2: i32) -> (i32, i32) {
    %c0_i32 = arith.constant 0 : i32
    %c0_i32_0 = arith.constant 0 : i32
    %c0_i32_1 = arith.constant 0 : i32
    return %c0_i32, %c0_i32_0 : i32, i32
  }
  func.func @transform_6(%arg0: i32, %arg1: i32, %arg2: i32) -> (i32, i32) {
    %0 = arith.muli %arg1, %arg0 : i32
    %c0_i32 = arith.constant 0 : i32
    %c0_i32_0 = arith.constant 0 : i32
    return %0, %c0_i32 : i32, i32
  }
}

module attributes {stable_mosaic.version = 11 : i64} {
  func.func @_fused_gcn_kernel(%arg0: i32, %arg1: i32, %arg2: i32, %arg3: memref<128x128xi8, #tpu.memory_space<vmem>>, %arg4: memref<128x1xf32, #tpu.memory_space<vmem>>, %arg5: memref<128x128xbf16, #tpu.memory_space<vmem>>, %arg6: memref<1x128xf32, #tpu.memory_space<vmem>>, %arg7: memref<128x128xbf16, #tpu.memory_space<vmem>>, %arg8: memref<1x128xf32, #tpu.memory_space<vmem>>, %arg9: memref<128x128xf32, #tpu.memory_space<vmem>>, %arg10: memref<128x128xbf16, #tpu.memory_space<vmem>>, %arg11: memref<128x128xf32, #tpu.memory_space<vmem>>) attributes {dimension_semantics = [#tpu.dimension_semantics<arbitrary>, #tpu.dimension_semantics<arbitrary>, #tpu.dimension_semantics<arbitrary>], iteration_bounds = array<i64: 2, 1, 1>, scalar_prefetch = 0 : i64, scratch_operands = 2 : i64, tpu.core_type = #tpu.core_type<tc>, window_params = [{transform_indices = @transform_0, window_bounds = array<i64: 128, 128>}, {transform_indices = @transform_1, window_bounds = array<i64: 128, 1>}, {pipeline_mode = #tpu.pipeline_mode<synchronous>, transform_indices = @transform_2, window_bounds = array<i64: 128, 128>}, {pipeline_mode = #tpu.pipeline_mode<synchronous>, transform_indices = @transform_3, window_bounds = array<i64: 1, 128>}, {pipeline_mode = #tpu.pipeline_mode<synchronous>, transform_indices = @transform_4, window_bounds = array<i64: 128, 128>}, {pipeline_mode = #tpu.pipeline_mode<synchronous>, transform_indices = @transform_5, window_bounds = array<i64: 1, 128>}, {transform_indices = @transform_6, window_bounds = array<i64: 128, 128>}]} {
    %c0_i32 = arith.constant 0 : i32
    %0 = arith.cmpi eq, %arg2, %c0_i32 : i32
    %1 = arith.extui %0 : i1 to i32
    %c0_i32_0 = arith.constant 0 : i32
    %2 = arith.cmpi ne, %1, %c0_i32_0 : i32
    scf.if %2 {
      %cst = arith.constant 0.000000e+00 : f32
      %24 = vector.broadcast %cst : f32 to vector<128x128xf32>
      %c0_11 = arith.constant 0 : index
      %c0_12 = arith.constant 0 : index
      %25 = vector.load %arg11[%c0_11, %c0_12] : memref<128x128xf32, #tpu.memory_space<vmem>>, vector<128x128xf32>
      tpu.vector_store %arg11[%c0_11, %c0_12], %24 {strides = array<i32>} : memref<128x128xf32, #tpu.memory_space<vmem>>, vector<128x128xf32>,
    } else {
    }
    %c0 = arith.constant 0 : index
    %c0_1 = arith.constant 0 : index
    %3 = vector.load %arg3[%c0, %c0_1] : memref<128x128xi8, #tpu.memory_space<vmem>>, vector<128x128xi8>
    %4 = arith.sitofp %3 : vector<128x128xi8> to vector<128x128xf32>
    %5 = arith.truncf %4 : vector<128x128xf32> to vector<128x128xbf16>
    %c128_i32 = arith.constant 128 : i32
    %6 = arith.muli %arg2, %c128_i32 : i32
    %7 = tpu.assume_multiple %6, 128 : i32
    %c0_i32_2 = arith.constant 0 : i32
    %8 = arith.cmpi eq, %arg0, %c0_i32_2 : i32
    %9 = arith.extui %8 : i1 to i32
    %c0_i32_3 = arith.constant 0 : i32
    %10 = arith.cmpi ne, %9, %c0_i32_3 : i32
    scf.if %10 {
      %c0_11 = arith.constant 0 : index
      %c0_12 = arith.constant 0 : index
      %24 = vector.load %arg11[%c0_11, %c0_12] : memref<128x128xf32, #tpu.memory_space<vmem>>, vector<128x128xf32>
      %25 = arith.index_cast %7 : i32 to index
      %c0_13 = arith.constant 0 : index
      %26 = vector.load %arg5[%25, %c0_13] : memref<128x128xbf16, #tpu.memory_space<vmem>>, vector<128x128xbf16>
      %cst = arith.constant dense<0.000000e+00> : vector<128x128xf32>
      %27 = tpu.matmul %5, %26, %cst {dimension_numbers = #tpu.dot_dimension_numbers<[1], [0], [0], [1], [0, 0, 1, 1], [], []>} : vector<128x128xbf16>, vector<128x128xbf16>, vector<128x128xf32> -> vector<128x128xf32>
      %28 = arith.addf %24, %27 : vector<128x128xf32>
      %c0_14 = arith.constant 0 : index
      %c0_15 = arith.constant 0 : index
      %29 = vector.load %arg11[%c0_14, %c0_15] : memref<128x128xf32, #tpu.memory_space<vmem>>, vector<128x128xf32>
      tpu.vector_store %arg11[%c0_14, %c0_15], %28 {strides = array<i32>} : memref<128x128xf32, #tpu.memory_space<vmem>>, vector<128x128xf32>,
    } else {
    }
    %c1_i32 = arith.constant 1 : i32
    %11 = arith.cmpi eq, %arg0, %c1_i32 : i32
    %12 = arith.extui %11 : i1 to i32
    %c0_i32_4 = arith.constant 0 : i32
    %13 = arith.cmpi ne, %12, %c0_i32_4 : i32
    scf.if %13 {
      %c0_11 = arith.constant 0 : index
      %c0_12 = arith.constant 0 : index
      %24 = vector.load %arg11[%c0_11, %c0_12] : memref<128x128xf32, #tpu.memory_space<vmem>>, vector<128x128xf32>
      %25 = arith.index_cast %7 : i32 to index
      %c0_13 = arith.constant 0 : index
      %26 = vector.load %arg10[%25, %c0_13] : memref<128x128xbf16, #tpu.memory_space<vmem>>, vector<128x128xbf16>
      %cst = arith.constant dense<0.000000e+00> : vector<128x128xf32>
      %27 = tpu.matmul %5, %26, %cst {dimension_numbers = #tpu.dot_dimension_numbers<[1], [0], [0], [1], [0, 0, 1, 1], [], []>} : vector<128x128xbf16>, vector<128x128xbf16>, vector<128x128xf32> -> vector<128x128xf32>
      %28 = arith.addf %24, %27 : vector<128x128xf32>
      %c0_14 = arith.constant 0 : index
      %c0_15 = arith.constant 0 : index
      %29 = vector.load %arg11[%c0_14, %c0_15] : memref<128x128xf32, #tpu.memory_space<vmem>>, vector<128x128xf32>
      tpu.vector_store %arg11[%c0_14, %c0_15], %28 {strides = array<i32>} : memref<128x128xf32, #tpu.memory_space<vmem>>, vector<128x128xf32>,
    } else {
    }
    %c0_i32_5 = arith.constant 0 : i32
    %14 = arith.cmpi eq, %arg0, %c0_i32_5 : i32
    %c0_i32_6 = arith.constant 0 : i32
    %15 = arith.cmpi eq, %arg2, %c0_i32_6 : i32
    %16 = arith.andi %14, %15 : i1
    %17 = arith.extui %16 : i1 to i32
    %c0_i32_7 = arith.constant 0 : i32
    %18 = arith.cmpi ne, %17, %c0_i32_7 : i32
    scf.if %18 {
      %c0_11 = arith.constant 0 : index
      %c0_12 = arith.constant 0 : index
      %24 = vector.load %arg11[%c0_11, %c0_12] : memref<128x128xf32, #tpu.memory_space<vmem>>, vector<128x128xf32>
      %c0_13 = arith.constant 0 : index
      %c0_14 = arith.constant 0 : index
      %25 = vector.load %arg4[%c0_13, %c0_14] : memref<128x1xf32, #tpu.memory_space<vmem>>, vector<128x1xf32>
      %26 = vector.broadcast %25 : vector<128x1xf32> to vector<128x128xf32>
      %27 = arith.mulf %24, %26 : vector<128x128xf32>
      %c0_15 = arith.constant 0 : index
      %c0_16 = arith.constant 0 : index
      %28 = vector.load %arg6[%c0_15, %c0_16] : memref<1x128xf32, #tpu.memory_space<vmem>>, vector<1x128xf32>
      %29 = vector.broadcast %28 : vector<1x128xf32> to vector<128x128xf32>
      %30 = arith.addf %27, %29 : vector<128x128xf32>
      %cst = arith.constant 0.000000e+00 : f32
      %31 = vector.broadcast %cst : f32 to vector<128x128xf32>
      %32 = arith.maximumf %30, %31 : vector<128x128xf32>
      %33 = arith.truncf %32 : vector<128x128xf32> to vector<128x128xbf16>
      %c0_17 = arith.constant 0 : index
      %c0_18 = arith.constant 0 : index
      %34 = vector.load %arg7[%c0_17, %c0_18] : memref<128x128xbf16, #tpu.memory_space<vmem>>, vector<128x128xbf16>
      %cst_19 = arith.constant dense<0.000000e+00> : vector<128x128xf32>
      %35 = tpu.matmul %33, %34, %cst_19 {dimension_numbers = #tpu.dot_dimension_numbers<[1], [0], [0], [1], [0, 0, 1, 1], [], []>} : vector<128x128xbf16>, vector<128x128xbf16>, vector<128x128xf32> -> vector<128x128xf32>
      %c128_i32_20 = arith.constant 128 : i32
      %36 = arith.muli %arg1, %c128_i32_20 : i32
      %37 = tpu.assume_multiple %36, 128 : i32
      %38 = arith.truncf %35 : vector<128x128xf32> to vector<128x128xbf16>
      %39 = arith.index_cast %37 : i32 to index
      %c0_21 = arith.constant 0 : index
      %40 = vector.load %arg10[%39, %c0_21] : memref<128x128xbf16, #tpu.memory_space<vmem>>, vector<128x128xbf16>
      tpu.vector_store %arg10[%39, %c0_21], %38 {strides = array<i32>} : memref<128x128xbf16, #tpu.memory_space<vmem>>, vector<128x128xbf16>,
    } else {
    }
    %c1_i32_8 = arith.constant 1 : i32
    %19 = arith.cmpi eq, %arg0, %c1_i32_8 : i32
    %c0_i32_9 = arith.constant 0 : i32
    %20 = arith.cmpi eq, %arg2, %c0_i32_9 : i32
    %21 = arith.andi %19, %20 : i1
    %22 = arith.extui %21 : i1 to i32
    %c0_i32_10 = arith.constant 0 : i32
    %23 = arith.cmpi ne, %22, %c0_i32_10 : i32
    scf.if %23 {
      %c0_11 = arith.constant 0 : index
      %c0_12 = arith.constant 0 : index
      %24 = vector.load %arg11[%c0_11, %c0_12] : memref<128x128xf32, #tpu.memory_space<vmem>>, vector<128x128xf32>
      %c0_13 = arith.constant 0 : index
      %c0_14 = arith.constant 0 : index
      %25 = vector.load %arg4[%c0_13, %c0_14] : memref<128x1xf32, #tpu.memory_space<vmem>>, vector<128x1xf32>
      %26 = vector.broadcast %25 : vector<128x1xf32> to vector<128x128xf32>
      %27 = arith.mulf %24, %26 : vector<128x128xf32>
      %c0_15 = arith.constant 0 : index
      %c0_16 = arith.constant 0 : index
      %28 = vector.load %arg8[%c0_15, %c0_16] : memref<1x128xf32, #tpu.memory_space<vmem>>, vector<1x128xf32>
      %29 = vector.broadcast %28 : vector<1x128xf32> to vector<128x128xf32>
      %30 = arith.addf %27, %29 : vector<128x128xf32>
      %c0_17 = arith.constant 0 : index
      %c0_18 = arith.constant 0 : index
      %31 = vector.load %arg9[%c0_17, %c0_18] : memref<128x128xf32, #tpu.memory_space<vmem>>, vector<128x128xf32>
      tpu.vector_store %arg9[%c0_17, %c0_18], %30 {strides = array<i32>} : memref<128x128xf32, #tpu.memory_space<vmem>>, vector<128x128xf32>,
    } else {
    }
    return
  }
  func.func @transform_0(%arg0: i32, %arg1: i32, %arg2: i32) -> (i32, i32) {
    %c0_i32 = arith.constant 0 : i32
    return %arg1, %arg2 : i32, i32
  }
  func.func @transform_1(%arg0: i32, %arg1: i32, %arg2: i32) -> (i32, i32) {
    %c0_i32 = arith.constant 0 : i32
    %c0_i32_0 = arith.constant 0 : i32
    return %arg1, %c0_i32 : i32, i32
  }
  func.func @transform_2(%arg0: i32, %arg1: i32, %arg2: i32) -> (i32, i32) {
    %c0_i32 = arith.constant 0 : i32
    %c0_i32_0 = arith.constant 0 : i32
    %c0_i32_1 = arith.constant 0 : i32
    return %c0_i32, %c0_i32_0 : i32, i32
  }
  func.func @transform_3(%arg0: i32, %arg1: i32, %arg2: i32) -> (i32, i32) {
    %c0_i32 = arith.constant 0 : i32
    %c0_i32_0 = arith.constant 0 : i32
    %c0_i32_1 = arith.constant 0 : i32
    return %c0_i32, %c0_i32_0 : i32, i32
  }
  func.func @transform_4(%arg0: i32, %arg1: i32, %arg2: i32) -> (i32, i32) {
    %c0_i32 = arith.constant 0 : i32
    %c0_i32_0 = arith.constant 0 : i32
    %c0_i32_1 = arith.constant 0 : i32
    return %c0_i32, %c0_i32_0 : i32, i32
  }
  func.func @transform_5(%arg0: i32, %arg1: i32, %arg2: i32) -> (i32, i32) {
    %c0_i32 = arith.constant 0 : i32
    %c0_i32_0 = arith.constant 0 : i32
    %c0_i32_1 = arith.constant 0 : i32
    return %c0_i32, %c0_i32_0 : i32, i32
  }
  func.func @transform_6(%arg0: i32, %arg1: i32, %arg2: i32) -> (i32, i32) {
    %0 = arith.muli %arg1, %arg0 : i32
    %c0_i32 = arith.constant 0 : i32
    %c0_i32_0 = arith.constant 0 : i32
    return %0, %c0_i32 : i32, i32
  }
}

</mosaic_0001>

<llo_original>
// kernel: tpu_custom_call.1
$region0: #{tpu_custom_call.1}
  #allocation0 [shape = 'u32[]', space=smem, size = 0x4, offset = 0x4, fixed_abs, tag = 'smem constant byte address 0x4 - core index']
  #allocation1 [shape = 'u32[144,128]{1,0:T(1,128)}', space=vmem, size = 0x12000, scoped, tag = 'internal scratch']
  #allocation2 [shape = 'bf16[128,128]{1,0:T(16,128)(2,1)}', space=vmem, size = 0x8000, scoped, tag = 'scratch operand']
  #allocation3 [shape = 'f32[128,128]{1,0:T(8,128)}', space=vmem, size = 0x10000, scoped, tag = 'scratch operand']
  %s0 = inlined_call_operand.hbm [shape: s8[128,128], index: 0, kind: input, shape index: {}]
  %s1 = inlined_call_operand.vmem [shape: f32[128,1], index: 1, kind: input, shape index: {}]
  %s2 = inlined_call_operand.vmem [shape: bf16[128,128], index: 2, kind: input, shape index: {}]
  %s3 = inlined_call_operand.vmem [shape: f32[1,128], index: 3, kind: input, shape index: {}]
  %s4 = inlined_call_operand.vmem [shape: bf16[128,128], index: 4, kind: input, shape index: {}]
  %s5 = inlined_call_operand.vmem [shape: f32[1,128], index: 5, kind: input, shape index: {}]
  %s6 = inlined_call_operand.hbm [shape: f32[128,128], index: 6, kind: output, shape index: {}]
  %s7 = sld [smem:[#allocation0]]
  $region81: #{tpu_custom_call.1} parent=0
    _
  %s9 = ssub.s32 1, %s7
  %s10 = scalar_select 0, %s9, %s7
  $region1: #{tpu_custom_call.1} parent=0
    #allocation4 [shape = 'u8[16384]{0}', space=vmem, size = 0x4000, scoped, tag = 'input window, operand 0, single buffered']
    #allocation5 [shape = 's32[2]{0}', space=sflag, size = 0x8, scoped, tag = 'scoped memory for tpu_custom_call.1']
    #allocation6 [shape = 's32[2]{0}', space=sflag, size = 0x8, scoped, tag = 'scoped memory for tpu_custom_call.1']
    #allocation7 [shape = 'u8[131072]{0}', space=vmem, size = 0x20000, scoped, tag = 'output window, operand 0']
    %11 = vsyncpa [#allocation5], 0
    %12 = vsyncpa [#allocation6], 0
    %s13 = scalar_lea.sflag [#allocation6], 1
    %14 = vsyncpa %s13, 0
    loop: start=0, step=1, limit=4
    $region2: #{tpu_custom_call.1} parent=1 // loop_pre_header
      _
    $region3: #{tpu_custom_call.1} parent=1 // loop_header
      %s16 = sphi 0, %s20
      %p17 = scmp.ge.s32.totalorder %s16, 4
      %s23 = sphi 0, %s42
      %s24 = sphi 0, %s38
      %s25 = sphi 0, %s34
      %s26 = sphi 0, %s23
      %s27 = sphi 0, %s24
      %s28 = sphi 0, %s25
      %s29 = sphi 0, %s26
      %s30 = sphi 0, %s27
      %s31 = sphi 0, %s28
      %s47 = sphi 0, %s49
      %s50 = sphi 0, %s47
      %s51 = sphi 0, %s50
      %s67 = sphi 0, %s51
      %s73 = sphi 0, %s75
      %s76 = sphi 0, %s73
      %s77 = sphi 0, %s76
      %s93 = sphi 0, %s77
      %s97 = sphi 0, %s97
      %s99 = sphi 0, %s97
      %s100 = sphi 0, %s99
      %s114 = sphi 0, %s100
      %s118 = sphi 0, %s118
      %s120 = sphi 0, %s118
      %s121 = sphi 0, %s120
      %s135 = sphi 0, %s121
      %s139 = sphi 0, %s139
      %s141 = sphi 0, %s139
      %s142 = sphi 0, %s141
      %s156 = sphi 0, %s142
      %s160 = sphi 0, %s160
      %s162 = sphi 0, %s160
      %s163 = sphi 0, %s162
      %s177 = sphi 0, %s163
      %s185 = sphi 0, %s187
      %s188 = sphi 0, %s185
      %s189 = sphi 0, %s188
      %s205 = sphi 0, %s189
    $region4: #{tpu_custom_call.1} parent=1 // loop_header_branch
      %19 = sbr.rel (%p17) target = $region8
    $region5: #{tpu_custom_call.1} parent=1 // loop_body
      %s21 = ssub.s32 %s16, 1
      %s22 = ssub.s32 %s16, 2
      %s32 = sadd.s32 1, %s25
      %p33 = scmp.ge.s32.totalorder %s32, 1
      %s34 = scalar_select %p33, 0, %s32
      %s35 = sadd.s32 1, %s24
      %s36 = scalar_select %p33, %s35, %s24
      %p37 = scmp.ge.s32.totalorder %s36, 1
      %s38 = scalar_select %p37, 0, %s36
      %s39 = sadd.s32 1, %s23
      %s40 = scalar_select %p37, %s39, %s23
      %p41 = scmp.ge.s32.totalorder %s40, 2
      %s42 = scalar_select %p41, 0, %s40
      %s43 = ssub.s32 %s24, %s38
      %s44 = ssub.s32 %s25, %s34
      %s45 = sor.u32 %s43, %s44
      %p46 = scmp.eq.s32.totalorder %s45, 0
      %s48 = sadd.s32 %s47, 1
      %s49 = scalar_select %p46, %s47, %s48
      %p52 = pneg %p46
      %p53 = scmp.eq.s32.totalorder %s16, 1
      %p54 = por %p52, %p53
      %p55 = scmp.ne.s32.totalorder %s47, %s50
      %p56 = scmp.eq.s32.totalorder %s16, 0
      %p57 = por %p55, %p56
      %p58 = scmp.ne.s32.totalorder %s47, %s50
      %p59 = scmp.eq.s32.totalorder %s21, 1
      %p60 = por %p58, %p59
      %p61 = scmp.ne.s32.totalorder %s50, %s51
      %p62 = scmp.eq.s32.totalorder %s21, 0
      %p63 = por %p61, %p62
      %p64 = scmp.ne.s32.totalorder %s50, %s51
      %p65 = scmp.eq.s32.totalorder %s22, 1
      %p66 = por %p64, %p65
      %p68 = scmp.ne.s32.totalorder %s51, %s67
      %p69 = scmp.eq.s32.totalorder %s22, 0
      %p70 = por %p68, %p69
      %s71 = ssub.s32 %s24, %s38
      %p72 = scmp.eq.s32.totalorder %s71, 0
      %s74 = sadd.s32 %s73, 1
      %s75 = scalar_select %p72, %s73, %s74
      %p78 = pneg %p72
      %p79 = scmp.eq.s32.totalorder %s16, 1
      %p80 = por %p78, %p79
      %p81 = scmp.ne.s32.totalorder %s73, %s76
      %p82 = scmp.eq.s32.totalorder %s16, 0
      %p83 = por %p81, %p82
      %p84 = scmp.ne.s32.totalorder %s73, %s76
      %p85 = scmp.eq.s32.totalorder %s21, 1
      %p86 = por %p84, %p85
      %p87 = scmp.ne.s32.totalorder %s76, %s77
      %p88 = scmp.eq.s32.totalorder %s21, 0
      %p89 = por %p87, %p88
      %p90 = scmp.ne.s32.totalorder %s76, %s77
      %p91 = scmp.eq.s32.totalorder %s22, 1
      %p92 = por %p90, %p91
      %p94 = scmp.ne.s32.totalorder %s77, %s93
      %p95 = scmp.eq.s32.totalorder %s22, 0
      %p96 = por %p94, %p95
      %s98 = sadd.s32 %s97, 1
      %p101 = scmp.eq.s32.totalorder %s16, 1
      %p102 = scmp.ne.s32.totalorder %s97, %s99
      %p103 = scmp.eq.s32.totalorder %s16, 0
      %p104 = por %p102, %p103
      %p105 = scmp.ne.s32.totalorder %s97, %s99
      %p106 = scmp.eq.s32.totalorder %s21, 1
      %p107 = por %p105, %p106
      %p108 = scmp.ne.s32.totalorder %s99, %s100
      %p109 = scmp.eq.s32.totalorder %s21, 0
      %p110 = por %p108, %p109
      %p111 = scmp.ne.s32.totalorder %s99, %s100
      %p112 = scmp.eq.s32.totalorder %s22, 1
      %p113 = por %p111, %p112
      %p115 = scmp.ne.s32.totalorder %s100, %s114
      %p116 = scmp.eq.s32.totalorder %s22, 0
      %p117 = por %p115, %p116
      %s119 = sadd.s32 %s118, 1
      %p122 = scmp.eq.s32.totalorder %s16, 1
      %p123 = scmp.ne.s32.totalorder %s118, %s120
      %p124 = scmp.eq.s32.totalorder %s16, 0
      %p125 = por %p123, %p124
      %p126 = scmp.ne.s32.totalorder %s118, %s120
      %p127 = scmp.eq.s32.totalorder %s21, 1
      %p128 = por %p126, %p127
      %p129 = scmp.ne.s32.totalorder %s120, %s121
      %p130 = scmp.eq.s32.totalorder %s21, 0
      %p131 = por %p129, %p130
      %p132 = scmp.ne.s32.totalorder %s120, %s121
      %p133 = scmp.eq.s32.totalorder %s22, 1
      %p134 = por %p132, %p133
      %p136 = scmp.ne.s32.totalorder %s121, %s135
      %p137 = scmp.eq.s32.totalorder %s22, 0
      %p138 = por %p136, %p137
      %s140 = sadd.s32 %s139, 1
      %p143 = scmp.eq.s32.totalorder %s16, 1
      %p144 = scmp.ne.s32.totalorder %s139, %s141
      %p145 = scmp.eq.s32.totalorder %s16, 0
      %p146 = por %p144, %p145
      %p147 = scmp.ne.s32.totalorder %s139, %s141
      %p148 = scmp.eq.s32.totalorder %s21, 1
      %p149 = por %p147, %p148
      %p150 = scmp.ne.s32.totalorder %s141, %s142
      %p151 = scmp.eq.s32.totalorder %s21, 0
      %p152 = por %p150, %p151
      %p153 = scmp.ne.s32.totalorder %s141, %s142
      %p154 = scmp.eq.s32.totalorder %s22, 1
      %p155 = por %p153, %p154
      %p157 = scmp.ne.s32.totalorder %s142, %s156
      %p158 = scmp.eq.s32.totalorder %s22, 0
      %p159 = por %p157, %p158
      %s161 = sadd.s32 %s160, 1
      %p164 = scmp.eq.s32.totalorder %s16, 1
      %p165 = scmp.ne.s32.totalorder %s160, %s162
      %p166 = scmp.eq.s32.totalorder %s16, 0
      %p167 = por %p165, %p166
      %p168 = scmp.ne.s32.totalorder %s160, %s162
      %p169 = scmp.eq.s32.totalorder %s21, 1
      %p170 = por %p168, %p169
      %p171 = scmp.ne.s32.totalorder %s162, %s163
      %p172 = scmp.eq.s32.totalorder %s21, 0
      %p173 = por %p171, %p172
      %p174 = scmp.ne.s32.totalorder %s162, %s163
      %p175 = scmp.eq.s32.totalorder %s22, 1
      %p176 = por %p174, %p175
      %p178 = scmp.ne.s32.totalorder %s163, %s177
      %p179 = scmp.eq.s32.totalorder %s22, 0
      %p180 = por %p178, %p179
      %s181 = smul.u32 %s24, %s23
      %s182 = smul.u32 %s38, %s42
      %s183 = ssub.s32 %s181, %s182
      %p184 = scmp.eq.s32.totalorder %s183, 0
      %s186 = sadd.s32 %s185, 1
      %s187 = scalar_select %p184, %s185, %s186
      %p190 = pneg %p184
      %p191 = scmp.eq.s32.totalorder %s16, 1
      %p192 = por %p190, %p191
      %p193 = scmp.ne.s32.totalorder %s185, %s188
      %p194 = scmp.eq.s32.totalorder %s16, 0
      %p195 = por %p193, %p194
      %p196 = scmp.ne.s32.totalorder %s185, %s188
      %p197 = scmp.eq.s32.totalorder %s21, 1
      %p198 = por %p196, %p197
      %p199 = scmp.ne.s32.totalorder %s188, %s189
      %p200 = scmp.eq.s32.totalorder %s21, 0
      %p201 = por %p199, %p200
      %p202 = scmp.ne.s32.totalorder %s188, %s189
      %p203 = scmp.eq.s32.totalorder %s22, 1
      %p204 = por %p202, %p203
      %p206 = scmp.ne.s32.totalorder %s189, %s205
      %p207 = scmp.eq.s32.totalorder %s22, 0
      %p208 = por %p206, %p207
      %p209 = scmp.le.s32.totalorder 1, %s16
      %p210 = scmp.lt.s32.totalorder %s16, 3
      %p211 = pnand %p209, %p210
      %p212 = pneg %p211
      // Predicated region
      $region9: #{tpu_custom_call.1} parent=5 // pred_check
        _
      $region10: #{tpu_custom_call.1} parent=5 // pred_check_branch
        %214 = sbr.rel (%p211) target = $region12
      $region11: #{tpu_custom_call.1} parent=5 // pred_region
        %s215 = ssub.s32 %s16, 1
        // Predicated region
        $region13: #{tpu_custom_call.1} parent=11 // pred_check
          %p216 = pneg %p63
        $region14: #{tpu_custom_call.1} parent=11 // pred_check_branch
          %218 = sbr.rel (%p216) target = $region16
        $region15: #{tpu_custom_call.1} parent=11 // pred_region
          %s219 = smul.u32 4, %s27
          %s221 = ssub.s32 512, 512
          %222 = vsyncadd [#allocation5], %s221
          %s223 = sadd.s32 %s28, %s219
          %s224 = smul.addr %s223, 128
          %s225 = scalar_lea.hbm %s0, %s224
          %s226 = sshll.u32 [#allocation4], 4
          %s227 = int_to_ptr.vmem [resolvable:$true] %s226
          %232 = dma.hbm_to_vmem [thread:$0]  %s225, 512, %s227, [#allocation5], 128, 128, 8
        $region16: #{tpu_custom_call.1} parent=11 // pred_fallthru
          _
        // Predicated region
        $region17: #{tpu_custom_call.1} parent=11 // pred_check
          %p233 = pneg %p89
        $region18: #{tpu_custom_call.1} parent=11 // pred_check_branch
          %235 = sbr.rel (%p233) target = $region20
        $region19: #{tpu_custom_call.1} parent=11 // pred_region
          %s236 = smul.u32 16, %s27
          %p237 = scmp.lt.s32.totalorder %s236, 15
          %s238 = scalar_select %p237, %s236, 15
          %s239 = smul.addr %s238, 8
          %s240 = scalar_lea.vmem %s1, %s239
          %s241 = smul.u32 16, %s27
        $region20: #{tpu_custom_call.1} parent=11 // pred_fallthru
          _
        // Predicated region
        $region21: #{tpu_custom_call.1} parent=11 // pred_check
          %p242 = pneg %p110
        $region22: #{tpu_custom_call.1} parent=11 // pred_check_branch
          %244 = sbr.rel (%p242) target = $region24
        $region23: #{tpu_custom_call.1} parent=11 // pred_region
          _
        $region24: #{tpu_custom_call.1} parent=11 // pred_fallthru
          _
        // Predicated region
        $region25: #{tpu_custom_call.1} parent=11 // pred_check
          %p245 = pneg %p131
        $region26: #{tpu_custom_call.1} parent=11 // pred_check_branch
          %247 = sbr.rel (%p245) target = $region28
        $region27: #{tpu_custom_call.1} parent=11 // pred_region
          _
        $region28: #{tpu_custom_call.1} parent=11 // pred_fallthru
          _
        // Predicated region
        $region29: #{tpu_custom_call.1} parent=11 // pred_check
          %p248 = pneg %p152
        $region30: #{tpu_custom_call.1} parent=11 // pred_check_branch
          %250 = sbr.rel (%p248) target = $region32
        $region31: #{tpu_custom_call.1} parent=11 // pred_region
          _
        $region32: #{tpu_custom_call.1} parent=11 // pred_fallthru
          _
        // Predicated region
        $region33: #{tpu_custom_call.1} parent=11 // pred_check
          %p251 = pneg %p173
        $region34: #{tpu_custom_call.1} parent=11 // pred_check_branch
          %253 = sbr.rel (%p251) target = $region36
        $region35: #{tpu_custom_call.1} parent=11 // pred_region
          _
        $region36: #{tpu_custom_call.1} parent=11 // pred_fallthru
          _
      $region12: #{tpu_custom_call.1} parent=5 // pred_fallthru
        _
      %p254 = scmp.lt.s32.totalorder %s16, 2
      // Predicated region
      $region37: #{tpu_custom_call.1} parent=5 // pred_check
        %p255 = pneg %p254
      $region38: #{tpu_custom_call.1} parent=5 // pred_check_branch
        %257 = sbr.rel (%p255) target = $region40
      $region39: #{tpu_custom_call.1} parent=5 // pred_region
        _
      $region40: #{tpu_custom_call.1} parent=5 // pred_fallthru
        _
      %p258 = scmp.le.s32.totalorder 1, %s16
      %p259 = scmp.lt.s32.totalorder %s16, 3
      %p260 = pnand %p258, %p259
      %p261 = pneg %p260
      // Predicated region
      $region41: #{tpu_custom_call.1} parent=5 // pred_check
        _
      $region42: #{tpu_custom_call.1} parent=5 // pred_check_branch
        %263 = sbr.rel (%p260) target = $region44
      $region43: #{tpu_custom_call.1} parent=5 // pred_region
        %s264 = ssub.s32 %s16, 1
        // Predicated region
        $region45: #{tpu_custom_call.1} parent=43 // pred_check
          %p265 = pneg %p63
        $region46: #{tpu_custom_call.1} parent=43 // pred_check_branch
          %267 = sbr.rel (%p265) target = $region48
        $region47: #{tpu_custom_call.1} parent=43 // pred_region
          %268 = dma.done [#allocation5], 512
        $region48: #{tpu_custom_call.1} parent=43 // pred_fallthru
          _
        %p269 = pneg %p63
        %p270 = pneg %p60
        %s271 = smul.u32 16, %s27
        %p272 = scmp.lt.s32.totalorder %s271, 15
        %s273 = scalar_select %p272, %s271, 15
        %s274 = smul.addr %s273, 8
        %s275 = scalar_lea.vmem %s1, %s274
        %p276 = pneg %p89
        %p277 = pneg %p86
        %p278 = pneg %p110
        %p279 = pneg %p107
        %p280 = pneg %p131
        %p281 = pneg %p128
        %p282 = pneg %p152
        %p283 = pneg %p149
        %p284 = pneg %p173
        %p285 = pneg %p170
        %p286 = pneg %p201
        %p287 = pneg %p198
        %s288 = sand.u32 %s188, 1
        %s289 = scalar_lea.sflag [#allocation6], %s288
        %s290 = sand.u32 %s188, 1
        %s291 = smul.addr %s290, 128
        %s292 = scalar_lea.vmem [#allocation7], %s291
        %s293 = smul.u32 4, %s27
        %s294 = smul.u32 16, %s27
        %p295 = scmp.lt.s32.totalorder %s294, 15
        %s296 = scalar_select %p295, %s294, 15
        %s297 = smul.addr %s296, 8
        %s298 = scalar_lea.vmem %s1, %s297
        %s299 = smul.u32 16, %s27
        %s300 = smul.u32 %s27, %s26
        %s301 = smul.u32 16, %s300
        %p303 = scmp.eq.s32.totalorder %s28, 0
        // Predicated region
        $region49: #{tpu_custom_call.1} parent=43 // pred_check
          %p304 = pneg %p303
        $region50: #{tpu_custom_call.1} parent=43 // pred_check_branch
          %306 = sbr.rel (%p304) target = $region52
        $region51: #{tpu_custom_call.1} parent=43 // pred_region
          %307 = vst [vmem:[#allocation3] sm:$0xff] 0.0
          %308 = vst [vmem:[#allocation3 + $0x8] sm:$0xff] 0.0
          %309 = vst [vmem:[#allocation3 + $0x10] sm:$0xff] 0.0
          %310 = vst [vmem:[#allocation3 + $0x18] sm:$0xff] 0.0
          %311 = vst [vmem:[#allocation3 + $0x20] sm:$0xff] 0.0
          %312 = vst [vmem:[#allocation3 + $0x28] sm:$0xff] 0.0
          %313 = vst [vmem:[#allocation3 + $0x30] sm:$0xff] 0.0
          %314 = vst [vmem:[#allocation3 + $0x38] sm:$0xff] 0.0
          %315 = vst [vmem:[#allocation3 + $0x40] sm:$0xff] 0.0
          %316 = vst [vmem:[#allocation3 + $0x48] sm:$0xff] 0.0
          %317 = vst [vmem:[#allocation3 + $0x50] sm:$0xff] 0.0
          %318 = vst [vmem:[#allocation3 + $0x58] sm:$0xff] 0.0
          %319 = vst [vmem:[#allocation3 + $0x60] sm:$0xff] 0.0
          %320 = vst [vmem:[#allocation3 + $0x68] sm:$0xff] 0.0
          %321 = vst [vmem:[#allocation3 + $0x70] sm:$0xff] 0.0
          %322 = vst [vmem:[#allocation3 + $0x78] sm:$0xff] 0.0
        $region52: #{tpu_custom_call.1} parent=43 // pred_fallthru
          _
        %v323 = vld [vmem:[#allocation4] sm:$0xff]
        %v324 = vld [vmem:[#allocation4 + $0x8] sm:$0xff]
        %v325 = vld [vmem:[#allocation4 + $0x10] sm:$0xff]
        %v326 = vld [vmem:[#allocation4 + $0x18] sm:$0xff]
        %v327 = vunpack.c.l.s8.bf16 %v323
        %v328 = vunpack.c.h.s8.bf16 %v323
        %v329 = vunpack.c.l.s8.bf16 %v324
        %v330 = vunpack.c.h.s8.bf16 %v324
        %v331 = vunpack.c.l.s8.bf16 %v325
        %v332 = vunpack.c.h.s8.bf16 %v325
        %v333 = vunpack.c.l.s8.bf16 %v326
        %v334 = vunpack.c.h.s8.bf16 %v326
        %s335 = smul.u32 %s28, 128
        %p336 = scmp.eq.s32.totalorder %s26, 0
        // Predicated region
        $region53: #{tpu_custom_call.1} parent=43 // pred_check
          %p337 = pneg %p336
        $region54: #{tpu_custom_call.1} parent=43 // pred_check_branch
          %339 = sbr.rel (%p337) target = $region56
        $region55: #{tpu_custom_call.1} parent=43 // pred_region
          %v340 = vld [vmem:[#allocation3] sm:$0xff]
          %v341 = vld [vmem:[#allocation3 + $0x8] sm:$0xff]
          %v342 = vld [vmem:[#allocation3 + $0x10] sm:$0xff]
          %v343 = vld [vmem:[#allocation3 + $0x18] sm:$0xff]
          %v344 = vld [vmem:[#allocation3 + $0x20] sm:$0xff]
          %v345 = vld [vmem:[#allocation3 + $0x28] sm:$0xff]
          %v346 = vld [vmem:[#allocation3 + $0x30] sm:$0xff]
          %v347 = vld [vmem:[#allocation3 + $0x38] sm:$0xff]
          %v348 = vld [vmem:[#allocation3 + $0x40] sm:$0xff]
          %v349 = vld [vmem:[#allocation3 + $0x48] sm:$0xff]
          %v350 = vld [vmem:[#allocation3 + $0x50] sm:$0xff]
          %v351 = vld [vmem:[#allocation3 + $0x58] sm:$0xff]
          %v352 = vld [vmem:[#allocation3 + $0x60] sm:$0xff]
          %v353 = vld [vmem:[#allocation3 + $0x68] sm:$0xff]
          %v354 = vld [vmem:[#allocation3 + $0x70] sm:$0xff]
          %v355 = vld [vmem:[#allocation3 + $0x78] sm:$0xff]
          %s356 = sshra.s32 %s335, 3
          %s357 = sand.u32 %s335, 7
          %s358 = smul.addr %s356, 4
          %s359 = scalar_lea.vmem %s2, %s358
          %v360 = vld [vmem:[%s359] sm:$0xf]
          %v361 = vld [vmem:[%s359 + $0x4] sm:$0xf]
          %v362 = vld [vmem:[%s359 + $0x8] sm:$0xf]
          %v363 = vld [vmem:[%s359 + $0xc] sm:$0xf]
          %v364 = vld [vmem:[%s359 + $0x10] sm:$0xf]
          %v365 = vld [vmem:[%s359 + $0x14] sm:$0xf]
          %v366 = vld [vmem:[%s359 + $0x18] sm:$0xf]
          %v367 = vld [vmem:[%s359 + $0x1c] sm:$0xf]
          %v368 = vld [vmem:[%s359 + $0x20] sm:$0xf]
          %v369 = vld [vmem:[%s359 + $0x24] sm:$0xf]
          %v370 = vld [vmem:[%s359 + $0x28] sm:$0xf]
          %v371 = vld [vmem:[%s359 + $0x2c] sm:$0xf]
          %v372 = vld [vmem:[%s359 + $0x30] sm:$0xf]
          %v373 = vld [vmem:[%s359 + $0x34] sm:$0xf]
          %v374 = vld [vmem:[%s359 + $0x38] sm:$0xf]
          %v375 = vld [vmem:[%s359 + $0x3c] sm:$0xf]
          %v392 = vunpack.c.l.b16 %v360
          %v393 = vunpack.c.l.b16 %v361
          %v394 = vunpack.c.l.b16 %v362
          %v395 = vunpack.c.l.b16 %v363
          %v396 = vunpack.c.l.b16 %v364
          %v397 = vunpack.c.l.b16 %v365
          %v398 = vunpack.c.l.b16 %v366
          %v399 = vunpack.c.l.b16 %v367
          %v400 = vunpack.c.l.b16 %v368
          %v401 = vunpack.c.l.b16 %v369
          %v402 = vunpack.c.l.b16 %v370
          %v403 = vunpack.c.l.b16 %v371
          %v404 = vunpack.c.l.b16 %v372
          %v405 = vunpack.c.l.b16 %v373
          %v406 = vunpack.c.l.b16 %v374
          %v407 = vunpack.c.l.b16 %v375
          %v408 = vpack.c.b16 %v393, %v392
          %v409 = vpack.c.b16 %v395, %v394
          %v410 = vpack.c.b16 %v397, %v396
          %v411 = vpack.c.b16 %v399, %v398
          %v412 = vpack.c.b16 %v401, %v400
          %v413 = vpack.c.b16 %v403, %v402
          %v414 = vpack.c.b16 %v405, %v404
          %v415 = vpack.c.b16 %v407, %v406
          %424 = vmatprep.subr.bf16.mxu0 0
          %425 = vmatpush1.bf16.msra.mxu0 %v408
          %426 = vmatprep.subr.bf16.mxu0 0
          %427 = vmatpush1.bf16.msra.mxu0 %v409
          %428 = vmatprep.subr.bf16.mxu0 0
          %429 = vmatpush1.bf16.msra.mxu0 %v410
          %430 = vmatprep.subr.bf16.mxu0 0
          %431 = vmatpush1.bf16.msra.mxu0 %v411
          %432 = vmatprep.subr.bf16.mxu0 0
          %433 = vmatpush1.bf16.msra.mxu0 %v412
          %434 = vmatprep.subr.bf16.mxu0 0
          %435 = vmatpush1.bf16.msra.mxu0 %v413
          %436 = vmatprep.subr.bf16.mxu0 0
          %437 = vmatpush1.bf16.msra.mxu0 %v414
          %438 = vmatprep.subr.bf16.mxu0 0
          %439 = vmatpush1.bf16.msra.mxu0 %v415
          %440 = vmatprep.subr.bf16.mxu0 0
          %441 = vmatpush1.bf16.msra.mxu0 0
          %442 = vmatprep.subr.bf16.mxu0 0
          %443 = vmatpush1.bf16.msra.mxu0 0
          %444 = vmatprep.subr.bf16.mxu0 0
          %445 = vmatpush1.bf16.msra.mxu0 0
          %446 = vmatprep.subr.bf16.mxu0 0
          %447 = vmatpush1.bf16.msra.mxu0 0
          %448 = vmatprep.subr.bf16.mxu0 0
          %449 = vmatpush1.bf16.msra.mxu0 0
          %450 = vmatprep.subr.bf16.mxu0 0
          %451 = vmatpush1.bf16.msra.mxu0 0
          %452 = vmatprep.subr.bf16.mxu0 0
          %453 = vmatpush1.bf16.msra.mxu0 0
          %454 = vmatprep.subr.bf16.mxu0 0
          %455 = vmatpush1.bf16.msra.mxu0 0
          %456 = vmatprep.mubr.bf16.mxu0 0
          %457 = vmatmul.mubr.bf16.gmra.mrb[0].mxu0 %v327
          %v458 = vpop.f32.mrb[0].mxu0
          %v459 = vadd.f32 0.0, %v458
          %v460 = vpop.f32.mrb[0].mxu0
          %v461 = vpop.f32.mrb[0].mxu0
          %v462 = vadd.f32 0.0, %v461
          %v463 = vpop.f32.mrb[0].mxu0
          %464 = vmatprep.mubr.bf16.mxu0 0
          %465 = vmatmul.mubr.bf16.gmra.mrb[0].mxu0 %v328
          %v466 = vpop.f32.mrb[0].mxu0
          %v467 = vadd.f32 0.0, %v466
          %v468 = vpop.f32.mrb[0].mxu0
          %v469 = vpop.f32.mrb[0].mxu0
          %v470 = vadd.f32 0.0, %v469
          %v471 = vpop.f32.mrb[0].mxu0
          %472 = vmatprep.mubr.bf16.mxu0 0
          %473 = vmatmul.mubr.bf16.gmra.mrb[0].mxu0 %v329
          %v474 = vpop.f32.mrb[0].mxu0
          %v475 = vadd.f32 0.0, %v474
          %v476 = vpop.f32.mrb[0].mxu0
          %v477 = vpop.f32.mrb[0].mxu0
          %v478 = vadd.f32 0.0, %v477
          %v479 = vpop.f32.mrb[0].mxu0
          %480 = vmatprep.mubr.bf16.mxu0 0
          %481 = vmatmul.mubr.bf16.gmra.mrb[0].mxu0 %v330
          %v482 = vpop.f32.mrb[0].mxu0
          %v483 = vadd.f32 0.0, %v482
          %v484 = vpop.f32.mrb[0].mxu0
          %v485 = vpop.f32.mrb[0].mxu0
          %v486 = vadd.f32 0.0, %v485
          %v487 = vpop.f32.mrb[0].mxu0
          %488 = vmatprep.mubr.bf16.mxu0 0
          %489 = vmatmul.mubr.bf16.gmra.mrb[0].mxu0 %v331
          %v490 = vpop.f32.mrb[0].mxu0
          %v491 = vadd.f32 0.0, %v490
          %v492 = vpop.f32.mrb[0].mxu0
          %v493 = vpop.f32.mrb[0].mxu0
          %v494 = vadd.f32 0.0, %v493
          %v495 = vpop.f32.mrb[0].mxu0
          %496 = vmatprep.mubr.bf16.mxu0 0
          %497 = vmatmul.mubr.bf16.gmra.mrb[0].mxu0 %v332
          %v498 = vpop.f32.mrb[0].mxu0
          %v499 = vadd.f32 0.0, %v498
          %v500 = vpop.f32.mrb[0].mxu0
          %v501 = vpop.f32.mrb[0].mxu0
          %v502 = vadd.f32 0.0, %v501
          %v503 = vpop.f32.mrb[0].mxu0
          %504 = vmatprep.mubr.bf16.mxu0 0
          %505 = vmatmul.mubr.bf16.gmra.mrb[0].mxu0 %v333
          %v506 = vpop.f32.mrb[0].mxu0
          %v507 = vadd.f32 0.0, %v506
          %v508 = vpop.f32.mrb[0].mxu0
          %v509 = vpop.f32.mrb[0].mxu0
          %v510 = vadd.f32 0.0, %v509
          %v511 = vpop.f32.mrb[0].mxu0
          %512 = vmatprep.mubr.bf16.mxu0 0
          %513 = vmatmul.mubr.bf16.gmra.mrb[0].mxu0 %v334
          %v514 = vpop.f32.mrb[0].mxu0
          %v515 = vadd.f32 0.0, %v514
          %v516 = vpop.f32.mrb[0].mxu0
          %v517 = vpop.f32.mrb[0].mxu0
          %v518 = vadd.f32 0.0, %v517
          %v519 = vpop.f32.mrb[0].mxu0
          %520 = vdwg.mxu0
          %v521 = vadd.f32 %v340, %v459
          %v522 = vadd.f32 %v341, %v462
          %v523 = vadd.f32 %v342, %v467
          %v524 = vadd.f32 %v343, %v470
          %v525 = vadd.f32 %v344, %v475
          %v526 = vadd.f32 %v345, %v478
          %v527 = vadd.f32 %v346, %v483
          %v528 = vadd.f32 %v347, %v486
          %v529 = vadd.f32 %v348, %v491
          %v530 = vadd.f32 %v349, %v494
          %v531 = vadd.f32 %v350, %v499
          %v532 = vadd.f32 %v351, %v502
          %v533 = vadd.f32 %v352, %v507
          %v534 = vadd.f32 %v353, %v510
          %v535 = vadd.f32 %v354, %v515
          %v536 = vadd.f32 %v355, %v518
          %537 = vst [vmem:[#allocation3] sm:$0xff] %v521
          %538 = vst [vmem:[#allocation3 + $0x8] sm:$0xff] %v522
          %539 = vst [vmem:[#allocation3 + $0x10] sm:$0xff] %v523
          %540 = vst [vmem:[#allocation3 + $0x18] sm:$0xff] %v524
          %541 = vst [vmem:[#allocation3 + $0x20] sm:$0xff] %v525
          %542 = vst [vmem:[#allocation3 + $0x28] sm:$0xff] %v526
          %543 = vst [vmem:[#allocation3 + $0x30] sm:$0xff] %v527
          %544 = vst [vmem:[#allocation3 + $0x38] sm:$0xff] %v528
          %545 = vst [vmem:[#allocation3 + $0x40] sm:$0xff] %v529
          %546 = vst [vmem:[#allocation3 + $0x48] sm:$0xff] %v530
          %547 = vst [vmem:[#allocation3 + $0x50] sm:$0xff] %v531
          %548 = vst [vmem:[#allocation3 + $0x58] sm:$0xff] %v532
          %549 = vst [vmem:[#allocation3 + $0x60] sm:$0xff] %v533
          %550 = vst [vmem:[#allocation3 + $0x68] sm:$0xff] %v534
          %551 = vst [vmem:[#allocation3 + $0x70] sm:$0xff] %v535
          %552 = vst [vmem:[#allocation3 + $0x78] sm:$0xff] %v536
        $region56: #{tpu_custom_call.1} parent=43 // pred_fallthru
          _
        %p553 = scmp.eq.s32.totalorder %s26, 1
        // Predicated region
        $region57: #{tpu_custom_call.1} parent=43 // pred_check
          %p554 = pneg %p553
        $region58: #{tpu_custom_call.1} parent=43 // pred_check_branch
          %556 = sbr.rel (%p554) target = $region60
        $region59: #{tpu_custom_call.1} parent=43 // pred_region
          %v557 = vld [vmem:[#allocation3] sm:$0xff]
          %v558 = vld [vmem:[#allocation3 + $0x8] sm:$0xff]
          %v559 = vld [vmem:[#allocation3 + $0x10] sm:$0xff]
          %v560 = vld [vmem:[#allocation3 + $0x18] sm:$0xff]
          %v561 = vld [vmem:[#allocation3 + $0x20] sm:$0xff]
          %v562 = vld [vmem:[#allocation3 + $0x28] sm:$0xff]
          %v563 = vld [vmem:[#allocation3 + $0x30] sm:$0xff]
          %v564 = vld [vmem:[#allocation3 + $0x38] sm:$0xff]
          %v565 = vld [vmem:[#allocation3 + $0x40] sm:$0xff]
          %v566 = vld [vmem:[#allocation3 + $0x48] sm:$0xff]
          %v567 = vld [vmem:[#allocation3 + $0x50] sm:$0xff]
          %v568 = vld [vmem:[#allocation3 + $0x58] sm:$0xff]
          %v569 = vld [vmem:[#allocation3 + $0x60] sm:$0xff]
          %v570 = vld [vmem:[#allocation3 + $0x68] sm:$0xff]
          %v571 = vld [vmem:[#allocation3 + $0x70] sm:$0xff]
          %v572 = vld [vmem:[#allocation3 + $0x78] sm:$0xff]
          %s573 = sshra.s32 %s335, 4
          %s574 = sand.u32 %s335, 15
          %s575 = smul.addr %s573, 8
          %s576 = scalar_lea.vmem [#allocation2], %s575
          %v577 = vld [vmem:[%s576] sm:$0xff]
          %v578 = vld [vmem:[%s576 + $0x8] sm:$0xff]
          %v579 = vld [vmem:[%s576 + $0x10] sm:$0xff]
          %v580 = vld [vmem:[%s576 + $0x18] sm:$0xff]
          %v581 = vld [vmem:[%s576 + $0x20] sm:$0xff]
          %v582 = vld [vmem:[%s576 + $0x28] sm:$0xff]
          %v583 = vld [vmem:[%s576 + $0x30] sm:$0xff]
          %v584 = vld [vmem:[%s576 + $0x38] sm:$0xff]
          %585 = vmatprep.subr.bf16.mxu0 0
          %586 = vmatpush1.bf16.msra.mxu0 %v577
          %587 = vmatprep.subr.bf16.mxu0 0
          %588 = vmatpush1.bf16.msra.mxu0 %v578
          %589 = vmatprep.subr.bf16.mxu0 0
          %590 = vmatpush1.bf16.msra.mxu0 %v579
          %591 = vmatprep.subr.bf16.mxu0 0
          %592 = vmatpush1.bf16.msra.mxu0 %v580
          %593 = vmatprep.subr.bf16.mxu0 0
          %594 = vmatpush1.bf16.msra.mxu0 %v581
          %595 = vmatprep.subr.bf16.mxu0 0
          %596 = vmatpush1.bf16.msra.mxu0 %v582
          %597 = vmatprep.subr.bf16.mxu0 0
          %598 = vmatpush1.bf16.msra.mxu0 %v583
          %599 = vmatprep.subr.bf16.mxu0 0
          %600 = vmatpush1.bf16.msra.mxu0 %v584
          %601 = vmatprep.subr.bf16.mxu0 0
          %602 = vmatpush1.bf16.msra.mxu0 0
          %603 = vmatprep.subr.bf16.mxu0 0
          %604 = vmatpush1.bf16.msra.mxu0 0
          %605 = vmatprep.subr.bf16.mxu0 0
          %606 = vmatpush1.bf16.msra.mxu0 0
          %607 = vmatprep.subr.bf16.mxu0 0
          %608 = vmatpush1.bf16.msra.mxu0 0
          %609 = vmatprep.subr.bf16.mxu0 0
          %610 = vmatpush1.bf16.msra.mxu0 0
          %611 = vmatprep.subr.bf16.mxu0 0
          %612 = vmatpush1.bf16.msra.mxu0 0
          %613 = vmatprep.subr.bf16.mxu0 0
          %614 = vmatpush1.bf16.msra.mxu0 0
          %615 = vmatprep.subr.bf16.mxu0 0
          %616 = vmatpush1.bf16.msra.mxu0 0
          %617 = vmatprep.mubr.bf16.mxu0 0
          %618 = vmatmul.mubr.bf16.gmra.mrb[0].mxu0 %v327
          %v619 = vpop.f32.mrb[0].mxu0
          %v620 = vadd.f32 0.0, %v619
          %v621 = vpop.f32.mrb[0].mxu0
          %v622 = vpop.f32.mrb[0].mxu0
          %v623 = vadd.f32 0.0, %v622
          %v624 = vpop.f32.mrb[0].mxu0
          %625 = vmatprep.mubr.bf16.mxu0 0
          %626 = vmatmul.mubr.bf16.gmra.mrb[0].mxu0 %v328
          %v627 = vpop.f32.mrb[0].mxu0
          %v628 = vadd.f32 0.0, %v627
          %v629 = vpop.f32.mrb[0].mxu0
          %v630 = vpop.f32.mrb[0].mxu0
          %v631 = vadd.f32 0.0, %v630
          %v632 = vpop.f32.mrb[0].mxu0
          %633 = vmatprep.mubr.bf16.mxu0 0
          %634 = vmatmul.mubr.bf16.gmra.mrb[0].mxu0 %v329
          %v635 = vpop.f32.mrb[0].mxu0
          %v636 = vadd.f32 0.0, %v635
          %v637 = vpop.f32.mrb[0].mxu0
          %v638 = vpop.f32.mrb[0].mxu0
          %v639 = vadd.f32 0.0, %v638
          %v640 = vpop.f32.mrb[0].mxu0
          %641 = vmatprep.mubr.bf16.mxu0 0
          %642 = vmatmul.mubr.bf16.gmra.mrb[0].mxu0 %v330
          %v643 = vpop.f32.mrb[0].mxu0
          %v644 = vadd.f32 0.0, %v643
          %v645 = vpop.f32.mrb[0].mxu0
          %v646 = vpop.f32.mrb[0].mxu0
          %v647 = vadd.f32 0.0, %v646
          %v648 = vpop.f32.mrb[0].mxu0
          %649 = vmatprep.mubr.bf16.mxu0 0
          %650 = vmatmul.mubr.bf16.gmra.mrb[0].mxu0 %v331
          %v651 = vpop.f32.mrb[0].mxu0
          %v652 = vadd.f32 0.0, %v651
          %v653 = vpop.f32.mrb[0].mxu0
          %v654 = vpop.f32.mrb[0].mxu0
          %v655 = vadd.f32 0.0, %v654
          %v656 = vpop.f32.mrb[0].mxu0
          %657 = vmatprep.mubr.bf16.mxu0 0
          %658 = vmatmul.mubr.bf16.gmra.mrb[0].mxu0 %v332
          %v659 = vpop.f32.mrb[0].mxu0
          %v660 = vadd.f32 0.0, %v659
          %v661 = vpop.f32.mrb[0].mxu0
          %v662 = vpop.f32.mrb[0].mxu0
          %v663 = vadd.f32 0.0, %v662
          %v664 = vpop.f32.mrb[0].mxu0
          %665 = vmatprep.mubr.bf16.mxu0 0
          %666 = vmatmul.mubr.bf16.gmra.mrb[0].mxu0 %v333
          %v667 = vpop.f32.mrb[0].mxu0
          %v668 = vadd.f32 0.0, %v667
          %v669 = vpop.f32.mrb[0].mxu0
          %v670 = vpop.f32.mrb[0].mxu0
          %v671 = vadd.f32 0.0, %v670
          %v672 = vpop.f32.mrb[0].mxu0
          %673 = vmatprep.mubr.bf16.mxu0 0
          %674 = vmatmul.mubr.bf16.gmra.mrb[0].mxu0 %v334
          %v675 = vpop.f32.mrb[0].mxu0
          %v676 = vadd.f32 0.0, %v675
          %v677 = vpop.f32.mrb[0].mxu0
          %v678 = vpop.f32.mrb[0].mxu0
          %v679 = vadd.f32 0.0, %v678
          %v680 = vpop.f32.mrb[0].mxu0
          %681 = vdwg.mxu0
          %v682 = vadd.f32 %v557, %v620
          %v683 = vadd.f32 %v558, %v623
          %v684 = vadd.f32 %v559, %v628
          %v685 = vadd.f32 %v560, %v631
          %v686 = vadd.f32 %v561, %v636
          %v687 = vadd.f32 %v562, %v639
          %v688 = vadd.f32 %v563, %v644
          %v689 = vadd.f32 %v564, %v647
          %v690 = vadd.f32 %v565, %v652
          %v691 = vadd.f32 %v566, %v655
          %v692 = vadd.f32 %v567, %v660
          %v693 = vadd.f32 %v568, %v663
          %v694 = vadd.f32 %v569, %v668
          %v695 = vadd.f32 %v570, %v671
          %v696 = vadd.f32 %v571, %v676
          %v697 = vadd.f32 %v572, %v679
          %698 = vst [vmem:[#allocation3] sm:$0xff] %v682
          %699 = vst [vmem:[#allocation3 + $0x8] sm:$0xff] %v683
          %700 = vst [vmem:[#allocation3 + $0x10] sm:$0xff] %v684
          %701 = vst [vmem:[#allocation3 + $0x18] sm:$0xff] %v685
          %702 = vst [vmem:[#allocation3 + $0x20] sm:$0xff] %v686
          %703 = vst [vmem:[#allocation3 + $0x28] sm:$0xff] %v687
          %704 = vst [vmem:[#allocation3 + $0x30] sm:$0xff] %v688
          %705 = vst [vmem:[#allocation3 + $0x38] sm:$0xff] %v689
          %706 = vst [vmem:[#allocation3 + $0x40] sm:$0xff] %v690
          %707 = vst [vmem:[#allocation3 + $0x48] sm:$0xff] %v691
          %708 = vst [vmem:[#allocation3 + $0x50] sm:$0xff] %v692
          %709 = vst [vmem:[#allocation3 + $0x58] sm:$0xff] %v693
          %710 = vst [vmem:[#allocation3 + $0x60] sm:$0xff] %v694
          %711 = vst [vmem:[#allocation3 + $0x68] sm:$0xff] %v695
          %712 = vst [vmem:[#allocation3 + $0x70] sm:$0xff] %v696
          %713 = vst [vmem:[#allocation3 + $0x78] sm:$0xff] %v697
        $region60: #{tpu_custom_call.1} parent=43 // pred_fallthru
          _
        %p714 = pnand %p336, %p303
        %p715 = pneg %p714
        // Predicated region
        $region61: #{tpu_custom_call.1} parent=43 // pred_check
          _
        $region62: #{tpu_custom_call.1} parent=43 // pred_check_branch
          %717 = sbr.rel (%p714) target = $region64
        $region63: #{tpu_custom_call.1} parent=43 // pred_region
          %v718 = vld [vmem:[#allocation3] sm:$0xff]
          %v719 = vld [vmem:[#allocation3 + $0x8] sm:$0xff]
          %v720 = vld [vmem:[#allocation3 + $0x10] sm:$0xff]
          %v721 = vld [vmem:[#allocation3 + $0x18] sm:$0xff]
          %v722 = vld [vmem:[#allocation3 + $0x20] sm:$0xff]
          %v723 = vld [vmem:[#allocation3 + $0x28] sm:$0xff]
          %v724 = vld [vmem:[#allocation3 + $0x30] sm:$0xff]
          %v725 = vld [vmem:[#allocation3 + $0x38] sm:$0xff]
          %v726 = vld [vmem:[#allocation3 + $0x40] sm:$0xff]
          %v727 = vld [vmem:[#allocation3 + $0x48] sm:$0xff]
          %v728 = vld [vmem:[#allocation3 + $0x50] sm:$0xff]
          %v729 = vld [vmem:[#allocation3 + $0x58] sm:$0xff]
          %v730 = vld [vmem:[#allocation3 + $0x60] sm:$0xff]
          %v731 = vld [vmem:[#allocation3 + $0x68] sm:$0xff]
          %v732 = vld [vmem:[#allocation3 + $0x70] sm:$0xff]
          %v733 = vld [vmem:[#allocation3 + $0x78] sm:$0xff]
          %v734 = vld [vmem:[%s298] sm:$0xff]
          %v735 = vld [vmem:[%s298 + $0x8] sm:$0xff]
          %v736 = vld [vmem:[%s298 + $0x10] sm:$0xff]
          %v737 = vld [vmem:[%s298 + $0x18] sm:$0xff]
          %v738 = vld [vmem:[%s298 + $0x20] sm:$0xff]
          %v739 = vld [vmem:[%s298 + $0x28] sm:$0xff]
          %v740 = vld [vmem:[%s298 + $0x30] sm:$0xff]
          %v741 = vld [vmem:[%s298 + $0x38] sm:$0xff]
          %v742 = vld [vmem:[%s298 + $0x40] sm:$0xff]
          %v743 = vld [vmem:[%s298 + $0x48] sm:$0xff]
          %v744 = vld [vmem:[%s298 + $0x50] sm:$0xff]
          %v745 = vld [vmem:[%s298 + $0x58] sm:$0xff]
          %v746 = vld [vmem:[%s298 + $0x60] sm:$0xff]
          %v747 = vld [vmem:[%s298 + $0x68] sm:$0xff]
          %v748 = vld [vmem:[%s298 + $0x70] sm:$0xff]
          %v749 = vld [vmem:[%s298 + $0x78] sm:$0xff]
          %751 = vset.pattern.permute.xlu0 0
          %752 = vperm.xlu0 %751, %v734
          %v753 = vpop.permute.xlu0 %752
          %756 = vset.pattern.permute.xlu0 0
          %757 = vperm.xlu0 %756, %v735
          %v758 = vpop.permute.xlu0 %757
          %761 = vset.pattern.permute.xlu0 0
          %762 = vperm.xlu0 %761, %v736
          %v763 = vpop.permute.xlu0 %762
          %766 = vset.pattern.permute.xlu0 0
          %767 = vperm.xlu0 %766, %v737
          %v768 = vpop.permute.xlu0 %767
          %771 = vset.pattern.permute.xlu0 0
          %772 = vperm.xlu0 %771, %v738
          %v773 = vpop.permute.xlu0 %772
          %776 = vset.pattern.permute.xlu0 0
          %777 = vperm.xlu0 %776, %v739
          %v778 = vpop.permute.xlu0 %777
          %781 = vset.pattern.permute.xlu0 0
          %782 = vperm.xlu0 %781, %v740
          %v783 = vpop.permute.xlu0 %782
          %786 = vset.pattern.permute.xlu0 0
          %787 = vperm.xlu0 %786, %v741
          %v788 = vpop.permute.xlu0 %787
          %791 = vset.pattern.permute.xlu0 0
          %792 = vperm.xlu0 %791, %v742
          %v793 = vpop.permute.xlu0 %792
          %796 = vset.pattern.permute.xlu0 0
          %797 = vperm.xlu0 %796, %v743
          %v798 = vpop.permute.xlu0 %797
          %801 = vset.pattern.permute.xlu0 0
          %802 = vperm.xlu0 %801, %v744
          %v803 = vpop.permute.xlu0 %802
          %806 = vset.pattern.permute.xlu0 0
          %807 = vperm.xlu0 %806, %v745
          %v808 = vpop.permute.xlu0 %807
          %811 = vset.pattern.permute.xlu0 0
          %812 = vperm.xlu0 %811, %v746
          %v813 = vpop.permute.xlu0 %812
          %816 = vset.pattern.permute.xlu0 0
          %817 = vperm.xlu0 %816, %v747
          %v818 = vpop.permute.xlu0 %817
          %821 = vset.pattern.permute.xlu0 0
          %822 = vperm.xlu0 %821, %v748
          %v823 = vpop.permute.xlu0 %822
          %826 = vset.pattern.permute.xlu0 0
          %827 = vperm.xlu0 %826, %v749
          %v828 = vpop.permute.xlu0 %827
          %v830 = vmul.f32 %v718, %v753
          %v831 = vmul.f32 %v719, %v758
          %v832 = vmul.f32 %v720, %v763
          %v833 = vmul.f32 %v721, %v768
          %v834 = vmul.f32 %v722, %v773
          %v835 = vmul.f32 %v723, %v778
          %v836 = vmul.f32 %v724, %v783
          %v837 = vmul.f32 %v725, %v788
          %v838 = vmul.f32 %v726, %v793
          %v839 = vmul.f32 %v727, %v798
          %v840 = vmul.f32 %v728, %v803
          %v841 = vmul.f32 %v729, %v808
          %v842 = vmul.f32 %v730, %v813
          %v843 = vmul.f32 %v731, %v818
          %v844 = vmul.f32 %v732, %v823
          %v845 = vmul.f32 %v733, %v828
          %v846 = vld [vmem:[%s3] sm:$0x1]
          %v848 = vlaneseq
          %v849 = vshrl.u32 %v848, 7
          %v850 = vsub.s32 0, %v849
          %v851 = vrot.slane %v846, %v850
          %v853 = vadd.f32 %v830, %v851
          %v854 = vadd.f32 %v831, %v851
          %v855 = vadd.f32 %v832, %v851
          %v856 = vadd.f32 %v833, %v851
          %v857 = vadd.f32 %v834, %v851
          %v858 = vadd.f32 %v835, %v851
          %v859 = vadd.f32 %v836, %v851
          %v860 = vadd.f32 %v837, %v851
          %v861 = vadd.f32 %v838, %v851
          %v862 = vadd.f32 %v839, %v851
          %v863 = vadd.f32 %v840, %v851
          %v864 = vadd.f32 %v841, %v851
          %v865 = vadd.f32 %v842, %v851
          %v866 = vadd.f32 %v843, %v851
          %v867 = vadd.f32 %v844, %v851
          %v868 = vadd.f32 %v845, %v851
          %v869 = vmax.f32 %v853, 0.0
          %v870 = vmax.f32 %v854, 0.0
          %v871 = vmax.f32 %v855, 0.0
          %v872 = vmax.f32 %v856, 0.0
          %v873 = vmax.f32 %v857, 0.0
          %v874 = vmax.f32 %v858, 0.0
          %v875 = vmax.f32 %v859, 0.0
          %v876 = vmax.f32 %v860, 0.0
          %v877 = vmax.f32 %v861, 0.0
          %v878 = vmax.f32 %v862, 0.0
          %v879 = vmax.f32 %v863, 0.0
          %v880 = vmax.f32 %v864, 0.0
          %v881 = vmax.f32 %v865, 0.0
          %v882 = vmax.f32 %v866, 0.0
          %v883 = vmax.f32 %v867, 0.0
          %v884 = vmax.f32 %v868, 0.0
          %v885 = vpack.c.bf16 %v870, %v869
          %v886 = vpack.c.bf16 %v872, %v871
          %v887 = vpack.c.bf16 %v874, %v873
          %v888 = vpack.c.bf16 %v876, %v875
          %v889 = vpack.c.bf16 %v878, %v877
          %v890 = vpack.c.bf16 %v880, %v879
          %v891 = vpack.c.bf16 %v882, %v881
          %v892 = vpack.c.bf16 %v884, %v883
          %v893 = vld [vmem:[%s4] sm:$0xf]
          %v894 = vld [vmem:[%s4 + $0x4] sm:$0xf]
          %v895 = vld [vmem:[%s4 + $0x8] sm:$0xf]
          %v896 = vld [vmem:[%s4 + $0xc] sm:$0xf]
          %v897 = vld [vmem:[%s4 + $0x10] sm:$0xf]
          %v898 = vld [vmem:[%s4 + $0x14] sm:$0xf]
          %v899 = vld [vmem:[%s4 + $0x18] sm:$0xf]
          %v900 = vld [vmem:[%s4 + $0x1c] sm:$0xf]
          %v901 = vld [vmem:[%s4 + $0x20] sm:$0xf]
          %v902 = vld [vmem:[%s4 + $0x24] sm:$0xf]
          %v903 = vld [vmem:[%s4 + $0x28] sm:$0xf]
          %v904 = vld [vmem:[%s4 + $0x2c] sm:$0xf]
          %v905 = vld [vmem:[%s4 + $0x30] sm:$0xf]
          %v906 = vld [vmem:[%s4 + $0x34] sm:$0xf]
          %v907 = vld [vmem:[%s4 + $0x38] sm:$0xf]
          %v908 = vld [vmem:[%s4 + $0x3c] sm:$0xf]
          %v925 = vunpack.c.l.b16 %v893
          %v926 = vunpack.c.l.b16 %v894
          %v927 = vunpack.c.l.b16 %v895
          %v928 = vunpack.c.l.b16 %v896
          %v929 = vunpack.c.l.b16 %v897
          %v930 = vunpack.c.l.b16 %v898
          %v931 = vunpack.c.l.b16 %v899
          %v932 = vunpack.c.l.b16 %v900
          %v933 = vunpack.c.l.b16 %v901
          %v934 = vunpack.c.l.b16 %v902
          %v935 = vunpack.c.l.b16 %v903
          %v936 = vunpack.c.l.b16 %v904
          %v937 = vunpack.c.l.b16 %v905
          %v938 = vunpack.c.l.b16 %v906
          %v939 = vunpack.c.l.b16 %v907
          %v940 = vunpack.c.l.b16 %v908
          %v941 = vpack.c.b16 %v926, %v925
          %v942 = vpack.c.b16 %v928, %v927
          %v943 = vpack.c.b16 %v930, %v929
          %v944 = vpack.c.b16 %v932, %v931
          %v945 = vpack.c.b16 %v934, %v933
          %v946 = vpack.c.b16 %v936, %v935
          %v947 = vpack.c.b16 %v938, %v937
          %v948 = vpack.c.b16 %v940, %v939
          %957 = vmatprep.subr.bf16.mxu0 0
          %958 = vmatpush1.bf16.msra.mxu0 %v941
          %959 = vmatprep.subr.bf16.mxu0 0
          %960 = vmatpush1.bf16.msra.mxu0 %v942
          %961 = vmatprep.subr.bf16.mxu0 0
          %962 = vmatpush1.bf16.msra.mxu0 %v943
          %963 = vmatprep.subr.bf16.mxu0 0
          %964 = vmatpush1.bf16.msra.mxu0 %v944
          %965 = vmatprep.subr.bf16.mxu0 0
          %966 = vmatpush1.bf16.msra.mxu0 %v945
          %967 = vmatprep.subr.bf16.mxu0 0
          %968 = vmatpush1.bf16.msra.mxu0 %v946
          %969 = vmatprep.subr.bf16.mxu0 0
          %970 = vmatpush1.bf16.msra.mxu0 %v947
          %971 = vmatprep.subr.bf16.mxu0 0
          %972 = vmatpush1.bf16.msra.mxu0 %v948
          %973 = vmatprep.subr.bf16.mxu0 0
          %974 = vmatpush1.bf16.msra.mxu0 0
          %975 = vmatprep.subr.bf16.mxu0 0
          %976 = vmatpush1.bf16.msra.mxu0 0
          %977 = vmatprep.subr.bf16.mxu0 0
          %978 = vmatpush1.bf16.msra.mxu0 0
          %979 = vmatprep.subr.bf16.mxu0 0
          %980 = vmatpush1.bf16.msra.mxu0 0
          %981 = vmatprep.subr.bf16.mxu0 0
          %982 = vmatpush1.bf16.msra.mxu0 0
          %983 = vmatprep.subr.bf16.mxu0 0
          %984 = vmatpush1.bf16.msra.mxu0 0
          %985 = vmatprep.subr.bf16.mxu0 0
          %986 = vmatpush1.bf16.msra.mxu0 0
          %987 = vmatprep.subr.bf16.mxu0 0
          %988 = vmatpush1.bf16.msra.mxu0 0
          %989 = vmatprep.mubr.bf16.mxu0 0
          %990 = vmatmul.mubr.bf16.gmra.mrb[0].mxu0 %v885
          %v991 = vpop.f32.mrb[0].mxu0
          %v992 = vadd.f32 0.0, %v991
          %v993 = vpop.f32.mrb[0].mxu0
          %v994 = vpop.f32.mrb[0].mxu0
          %v995 = vadd.f32 0.0, %v994
          %v996 = vpop.f32.mrb[0].mxu0
          %997 = vmatprep.mubr.bf16.mxu0 0
          %998 = vmatmul.mubr.bf16.gmra.mrb[0].mxu0 %v886
          %v999 = vpop.f32.mrb[0].mxu0
          %v1000 = vadd.f32 0.0, %v999
          %v1001 = vpop.f32.mrb[0].mxu0
          %v1002 = vpop.f32.mrb[0].mxu0
          %v1003 = vadd.f32 0.0, %v1002
          %v1004 = vpop.f32.mrb[0].mxu0
          %1005 = vmatprep.mubr.bf16.mxu0 0
          %1006 = vmatmul.mubr.bf16.gmra.mrb[0].mxu0 %v887
          %v1007 = vpop.f32.mrb[0].mxu0
          %v1008 = vadd.f32 0.0, %v1007
          %v1009 = vpop.f32.mrb[0].mxu0
          %v1010 = vpop.f32.mrb[0].mxu0
          %v1011 = vadd.f32 0.0, %v1010
          %v1012 = vpop.f32.mrb[0].mxu0
          %1013 = vmatprep.mubr.bf16.mxu0 0
          %1014 = vmatmul.mubr.bf16.gmra.mrb[0].mxu0 %v888
          %v1015 = vpop.f32.mrb[0].mxu0
          %v1016 = vadd.f32 0.0, %v1015
          %v1017 = vpop.f32.mrb[0].mxu0
          %v1018 = vpop.f32.mrb[0].mxu0
          %v1019 = vadd.f32 0.0, %v1018
          %v1020 = vpop.f32.mrb[0].mxu0
          %1021 = vmatprep.mubr.bf16.mxu0 0
          %1022 = vmatmul.mubr.bf16.gmra.mrb[0].mxu0 %v889
          %v1023 = vpop.f32.mrb[0].mxu0
          %v1024 = vadd.f32 0.0, %v1023
          %v1025 = vpop.f32.mrb[0].mxu0
          %v1026 = vpop.f32.mrb[0].mxu0
          %v1027 = vadd.f32 0.0, %v1026
          %v1028 = vpop.f32.mrb[0].mxu0
          %1029 = vmatprep.mubr.bf16.mxu0 0
          %1030 = vmatmul.mubr.bf16.gmra.mrb[0].mxu0 %v890
          %v1031 = vpop.f32.mrb[0].mxu0
          %v1032 = vadd.f32 0.0, %v1031
          %v1033 = vpop.f32.mrb[0].mxu0
          %v1034 = vpop.f32.mrb[0].mxu0
          %v1035 = vadd.f32 0.0, %v1034
          %v1036 = vpop.f32.mrb[0].mxu0
          %1037 = vmatprep.mubr.bf16.mxu0 0
          %1038 = vmatmul.mubr.bf16.gmra.mrb[0].mxu0 %v891
          %v1039 = vpop.f32.mrb[0].mxu0
          %v1040 = vadd.f32 0.0, %v1039
          %v1041 = vpop.f32.mrb[0].mxu0
          %v1042 = vpop.f32.mrb[0].mxu0
          %v1043 = vadd.f32 0.0, %v1042
          %v1044 = vpop.f32.mrb[0].mxu0
          %1045 = vmatprep.mubr.bf16.mxu0 0
          %1046 = vmatmul.mubr.bf16.gmra.mrb[0].mxu0 %v892
          %v1047 = vpop.f32.mrb[0].mxu0
          %v1048 = vadd.f32 0.0, %v1047
          %v1049 = vpop.f32.mrb[0].mxu0
          %v1050 = vpop.f32.mrb[0].mxu0
          %v1051 = vadd.f32 0.0, %v1050
          %v1052 = vpop.f32.mrb[0].mxu0
          %1053 = vdwg.mxu0
          %s1054 = smul.u32 %s27, 128
          %v1055 = vpack.c.bf16 %v995, %v992
          %v1056 = vpack.c.bf16 %v1003, %v1000
          %v1057 = vpack.c.bf16 %v1011, %v1008
          %v1058 = vpack.c.bf16 %v1019, %v1016
          %v1059 = vpack.c.bf16 %v1027, %v1024
          %v1060 = vpack.c.bf16 %v1035, %v1032
          %v1061 = vpack.c.bf16 %v1043, %v1040
          %v1062 = vpack.c.bf16 %v1051, %v1048
          %s1063 = sshra.s32 %s1054, 4
          %s1064 = sand.u32 %s1054, 15
          %s1065 = smul.addr %s1063, 8
          %s1066 = scalar_lea.vmem [#allocation2], %s1065
          %1067 = vst [vmem:[%s1066] sm:$0xff] %v1055
          %1068 = vst [vmem:[%s1066 + $0x8] sm:$0xff] %v1056
          %1069 = vst [vmem:[%s1066 + $0x10] sm:$0xff] %v1057
          %1070 = vst [vmem:[%s1066 + $0x18] sm:$0xff] %v1058
          %1071 = vst [vmem:[%s1066 + $0x20] sm:$0xff] %v1059
          %1072 = vst [vmem:[%s1066 + $0x28] sm:$0xff] %v1060
          %1073 = vst [vmem:[%s1066 + $0x30] sm:$0xff] %v1061
          %1074 = vst [vmem:[%s1066 + $0x38] sm:$0xff] %v1062
        $region64: #{tpu_custom_call.1} parent=43 // pred_fallthru
          _
        %p1075 = pnand %p553, %p303
        %p1076 = pneg %p1075
        // Predicated region
        $region65: #{tpu_custom_call.1} parent=43 // pred_check
          _
        $region66: #{tpu_custom_call.1} parent=43 // pred_check_branch
          %1078 = sbr.rel (%p1075) target = $region68
        $region67: #{tpu_custom_call.1} parent=43 // pred_region
          %v1079 = vld [vmem:[#allocation3] sm:$0xff]
          %v1080 = vld [vmem:[#allocation3 + $0x8] sm:$0xff]
          %v1081 = vld [vmem:[#allocation3 + $0x10] sm:$0xff]
          %v1082 = vld [vmem:[#allocation3 + $0x18] sm:$0xff]
          %v1083 = vld [vmem:[#allocation3 + $0x20] sm:$0xff]
          %v1084 = vld [vmem:[#allocation3 + $0x28] sm:$0xff]
          %v1085 = vld [vmem:[#allocation3 + $0x30] sm:$0xff]
          %v1086 = vld [vmem:[#allocation3 + $0x38] sm:$0xff]
          %v1087 = vld [vmem:[#allocation3 + $0x40] sm:$0xff]
          %v1088 = vld [vmem:[#allocation3 + $0x48] sm:$0xff]
          %v1089 = vld [vmem:[#allocation3 + $0x50] sm:$0xff]
          %v1090 = vld [vmem:[#allocation3 + $0x58] sm:$0xff]
          %v1091 = vld [vmem:[#allocation3 + $0x60] sm:$0xff]
          %v1092 = vld [vmem:[#allocation3 + $0x68] sm:$0xff]
          %v1093 = vld [vmem:[#allocation3 + $0x70] sm:$0xff]
          %v1094 = vld [vmem:[#allocation3 + $0x78] sm:$0xff]
          %v1095 = vld [vmem:[%s298] sm:$0xff]
          %v1096 = vld [vmem:[%s298 + $0x8] sm:$0xff]
          %v1097 = vld [vmem:[%s298 + $0x10] sm:$0xff]
          %v1098 = vld [vmem:[%s298 + $0x18] sm:$0xff]
          %v1099 = vld [vmem:[%s298 + $0x20] sm:$0xff]
          %v1100 = vld [vmem:[%s298 + $0x28] sm:$0xff]
          %v1101 = vld [vmem:[%s298 + $0x30] sm:$0xff]
          %v1102 = vld [vmem:[%s298 + $0x38] sm:$0xff]
          %v1103 = vld [vmem:[%s298 + $0x40] sm:$0xff]
          %v1104 = vld [vmem:[%s298 + $0x48] sm:$0xff]
          %v1105 = vld [vmem:[%s298 + $0x50] sm:$0xff]
          %v1106 = vld [vmem:[%s298 + $0x58] sm:$0xff]
          %v1107 = vld [vmem:[%s298 + $0x60] sm:$0xff]
          %v1108 = vld [vmem:[%s298 + $0x68] sm:$0xff]
          %v1109 = vld [vmem:[%s298 + $0x70] sm:$0xff]
          %v1110 = vld [vmem:[%s298 + $0x78] sm:$0xff]
          %1112 = vset.pattern.permute.xlu0 0
          %1113 = vperm.xlu0 %1112, %v1095
          %v1114 = vpop.permute.xlu0 %1113
          %1117 = vset.pattern.permute.xlu0 0
          %1118 = vperm.xlu0 %1117, %v1096
          %v1119 = vpop.permute.xlu0 %1118
          %1122 = vset.pattern.permute.xlu0 0
          %1123 = vperm.xlu0 %1122, %v1097
          %v1124 = vpop.permute.xlu0 %1123
          %1127 = vset.pattern.permute.xlu0 0
          %1128 = vperm.xlu0 %1127, %v1098
          %v1129 = vpop.permute.xlu0 %1128
          %1132 = vset.pattern.permute.xlu0 0
          %1133 = vperm.xlu0 %1132, %v1099
          %v1134 = vpop.permute.xlu0 %1133
          %1137 = vset.pattern.permute.xlu0 0
          %1138 = vperm.xlu0 %1137, %v1100
          %v1139 = vpop.permute.xlu0 %1138
          %1142 = vset.pattern.permute.xlu0 0
          %1143 = vperm.xlu0 %1142, %v1101
          %v1144 = vpop.permute.xlu0 %1143
          %1147 = vset.pattern.permute.xlu0 0
          %1148 = vperm.xlu0 %1147, %v1102
          %v1149 = vpop.permute.xlu0 %1148
          %1152 = vset.pattern.permute.xlu0 0
          %1153 = vperm.xlu0 %1152, %v1103
          %v1154 = vpop.permute.xlu0 %1153
          %1157 = vset.pattern.permute.xlu0 0
          %1158 = vperm.xlu0 %1157, %v1104
          %v1159 = vpop.permute.xlu0 %1158
          %1162 = vset.pattern.permute.xlu0 0
          %1163 = vperm.xlu0 %1162, %v1105
          %v1164 = vpop.permute.xlu0 %1163
          %1167 = vset.pattern.permute.xlu0 0
          %1168 = vperm.xlu0 %1167, %v1106
          %v1169 = vpop.permute.xlu0 %1168
          %1172 = vset.pattern.permute.xlu0 0
          %1173 = vperm.xlu0 %1172, %v1107
          %v1174 = vpop.permute.xlu0 %1173
          %1177 = vset.pattern.permute.xlu0 0
          %1178 = vperm.xlu0 %1177, %v1108
          %v1179 = vpop.permute.xlu0 %1178
          %1182 = vset.pattern.permute.xlu0 0
          %1183 = vperm.xlu0 %1182, %v1109
          %v1184 = vpop.permute.xlu0 %1183
          %1187 = vset.pattern.permute.xlu0 0
          %1188 = vperm.xlu0 %1187, %v1110
          %v1189 = vpop.permute.xlu0 %1188
          %v1191 = vmul.f32 %v1079, %v1114
          %v1192 = vmul.f32 %v1080, %v1119
          %v1193 = vmul.f32 %v1081, %v1124
          %v1194 = vmul.f32 %v1082, %v1129
          %v1195 = vmul.f32 %v1083, %v1134
          %v1196 = vmul.f32 %v1084, %v1139
          %v1197 = vmul.f32 %v1085, %v1144
          %v1198 = vmul.f32 %v1086, %v1149
          %v1199 = vmul.f32 %v1087, %v1154
          %v1200 = vmul.f32 %v1088, %v1159
          %v1201 = vmul.f32 %v1089, %v1164
          %v1202 = vmul.f32 %v1090, %v1169
          %v1203 = vmul.f32 %v1091, %v1174
          %v1204 = vmul.f32 %v1092, %v1179
          %v1205 = vmul.f32 %v1093, %v1184
          %v1206 = vmul.f32 %v1094, %v1189
          %v1207 = vld [vmem:[%s5] sm:$0x1]
          %v1209 = vlaneseq
          %v1210 = vshrl.u32 %v1209, 7
          %v1211 = vsub.s32 0, %v1210
          %v1212 = vrot.slane %v1207, %v1211
          %v1214 = vadd.f32 %v1191, %v1212
          %v1215 = vadd.f32 %v1192, %v1212
          %v1216 = vadd.f32 %v1193, %v1212
          %v1217 = vadd.f32 %v1194, %v1212
          %v1218 = vadd.f32 %v1195, %v1212
          %v1219 = vadd.f32 %v1196, %v1212
          %v1220 = vadd.f32 %v1197, %v1212
          %v1221 = vadd.f32 %v1198, %v1212
          %v1222 = vadd.f32 %v1199, %v1212
          %v1223 = vadd.f32 %v1200, %v1212
          %v1224 = vadd.f32 %v1201, %v1212
          %v1225 = vadd.f32 %v1202, %v1212
          %v1226 = vadd.f32 %v1203, %v1212
          %v1227 = vadd.f32 %v1204, %v1212
          %v1228 = vadd.f32 %v1205, %v1212
          %v1229 = vadd.f32 %v1206, %v1212
          %1230 = vst [vmem:[%s292] sm:$0xff] %v1214
          %1231 = vst [vmem:[%s292 + $0x8] sm:$0xff] %v1215
          %1232 = vst [vmem:[%s292 + $0x10] sm:$0xff] %v1216
          %1233 = vst [vmem:[%s292 + $0x18] sm:$0xff] %v1217
          %1234 = vst [vmem:[%s292 + $0x20] sm:$0xff] %v1218
          %1235 = vst [vmem:[%s292 + $0x28] sm:$0xff] %v1219
          %1236 = vst [vmem:[%s292 + $0x30] sm:$0xff] %v1220
          %1237 = vst [vmem:[%s292 + $0x38] sm:$0xff] %v1221
          %1238 = vst [vmem:[%s292 + $0x40] sm:$0xff] %v1222
          %1239 = vst [vmem:[%s292 + $0x48] sm:$0xff] %v1223
          %1240 = vst [vmem:[%s292 + $0x50] sm:$0xff] %v1224
          %1241 = vst [vmem:[%s292 + $0x58] sm:$0xff] %v1225
          %1242 = vst [vmem:[%s292 + $0x60] sm:$0xff] %v1226
          %1243 = vst [vmem:[%s292 + $0x68] sm:$0xff] %v1227
          %1244 = vst [vmem:[%s292 + $0x70] sm:$0xff] %v1228
          %1245 = vst [vmem:[%s292 + $0x78] sm:$0xff] %v1229
        $region68: #{tpu_custom_call.1} parent=43 // pred_fallthru
          _
        %s1246 = sand.u32 %s188, 1
        %s1247 = scalar_lea.sflag [#allocation6], %s1246
        %s1248 = sand.u32 %s188, 1
        %s1249 = smul.addr %s1248, 128
        %s1250 = scalar_lea.vmem [#allocation7], %s1249
        // Predicated region
        $region69: #{tpu_custom_call.1} parent=43 // pred_check
          %p1251 = pneg %p198
        $region70: #{tpu_custom_call.1} parent=43 // pred_check_branch
          %1253 = sbr.rel (%p1251) target = $region72
        $region71: #{tpu_custom_call.1} parent=43 // pred_region
          %s1254 = smul.u32 %s27, %s26
          %s1255 = smul.u32 16, %s1254
          %s1257 = ssub.s32 2048, 2048
          %1258 = vsyncadd %s1247, %s1257
          %s1259 = smul.addr %s1255, 128
          %s1260 = scalar_lea.hbm %s6, %s1259
          %s1261 = sshll.u32 %s1250, 4
          %s1262 = int_to_ptr.vmem [resolvable:$true] %s1261
          %1267 = dma.vmem_to_hbm [thread:$0]  %s1262, 2048, %s1260, %s1247, 128, 128, 8
        $region72: #{tpu_custom_call.1} parent=43 // pred_fallthru
          _
      $region44: #{tpu_custom_call.1} parent=5 // pred_fallthru
        _
      %p1268 = scmp.le.s32.totalorder 2, %s16
      // Predicated region
      $region73: #{tpu_custom_call.1} parent=5 // pred_check
        %p1269 = pneg %p1268
      $region74: #{tpu_custom_call.1} parent=5 // pred_check_branch
        %1271 = sbr.rel (%p1269) target = $region76
      $region75: #{tpu_custom_call.1} parent=5 // pred_region
        %s1272 = ssub.s32 %s16, 2
        // Predicated region
        $region77: #{tpu_custom_call.1} parent=75 // pred_check
          %p1273 = pneg %p204
        $region78: #{tpu_custom_call.1} parent=75 // pred_check_branch
          %1275 = sbr.rel (%p1273) target = $region80
        $region79: #{tpu_custom_call.1} parent=75 // pred_region
          %s1276 = sand.u32 %s189, 1
          %s1277 = scalar_lea.sflag [#allocation6], %s1276
          %s1278 = sand.u32 %s189, 1
          %s1279 = smul.addr %s1278, 128
          %s1280 = scalar_lea.vmem [#allocation7], %s1279
          %1281 = dma.done %s1277, 2048
        $region80: #{tpu_custom_call.1} parent=75 // pred_fallthru
          _
      $region76: #{tpu_custom_call.1} parent=5 // pred_fallthru
        _
    $region6: #{tpu_custom_call.1} parent=1 // loop_footer
      %s20 = sadd.s32 1, %s16
    $region7: #{tpu_custom_call.1} parent=1 // loop_footer_branch
      %15 = sbr.rel target = $region3
    $region8: #{tpu_custom_call.1} parent=1 // loop_exit
      _
    %1282 = vsyncpa [#allocation5], 1
    %s1283 = scalar_lea.sflag [#allocation5], 1
    %1284 = vsyncpa %s1283, 1
    %1285 = vsyncpa [#allocation6], 1
    %s1286 = scalar_lea.sflag [#allocation6], 1
    %1287 = vsyncpa %s1286, 1

// kernel: tpu_custom_call.1
$region0: #{tpu_custom_call.1}
  #allocation0 [shape = 'u32[]', space=smem, size = 0x4, offset = 0x4, fixed_abs, tag = 'smem constant byte address 0x4 - core index']
  #allocation1 [shape = 'u32[144,128]{1,0:T(1,128)}', space=vmem, size = 0x12000, scoped, tag = 'internal scratch']
  #allocation2 [shape = 'bf16[128,128]{1,0:T(16,128)(2,1)}', space=vmem, size = 0x8000, scoped, tag = 'scratch operand']
  #allocation3 [shape = 'f32[128,128]{1,0:T(8,128)}', space=vmem, size = 0x10000, scoped, tag = 'scratch operand']
  %s0 = inlined_call_operand.hbm [shape: s8[128,128], index: 0, kind: input, shape index: {}]
  %s1 = inlined_call_operand.vmem [shape: f32[128,1], index: 1, kind: input, shape index: {}]
  %s2 = inlined_call_operand.vmem [shape: bf16[128,128], index: 2, kind: input, shape index: {}]
  %s3 = inlined_call_operand.vmem [shape: f32[1,128], index: 3, kind: input, shape index: {}]
  %s4 = inlined_call_operand.vmem [shape: bf16[128,128], index: 4, kind: input, shape index: {}]
  %s5 = inlined_call_operand.vmem [shape: f32[1,128], index: 5, kind: input, shape index: {}]
  %s6 = inlined_call_operand.hbm [shape: f32[128,128], index: 6, kind: output, shape index: {}]
  %s7 = sld [smem:[#allocation0]]
  $region81: #{tpu_custom_call.1} parent=0
    _
  %s9 = ssub.s32 1, %s7
  %s10 = scalar_select 0, %s9, %s7
  $region1: #{tpu_custom_call.1} parent=0
    #allocation4 [shape = 'u8[16384]{0}', space=vmem, size = 0x4000, scoped, tag = 'input window, operand 0, single buffered']
    #allocation5 [shape = 's32[2]{0}', space=sflag, size = 0x8, scoped, tag = 'scoped memory for tpu_custom_call.1']
    #allocation6 [shape = 's32[2]{0}', space=sflag, size = 0x8, scoped, tag = 'scoped memory for tpu_custom_call.1']
    #allocation7 [shape = 'u8[131072]{0}', space=vmem, size = 0x20000, scoped, tag = 'output window, operand 0']
    %11 = vsyncpa [#allocation5], 0
    %12 = vsyncpa [#allocation6], 0
    %s13 = scalar_lea.sflag [#allocation6], 1
    %14 = vsyncpa %s13, 0
    loop: start=0, step=1, limit=4
    $region2: #{tpu_custom_call.1} parent=1 // loop_pre_header
      _
    $region3: #{tpu_custom_call.1} parent=1 // loop_header
      %s16 = sphi 0, %s20
      %p17 = scmp.ge.s32.totalorder %s16, 4
      %s23 = sphi 0, %s42
      %s24 = sphi 0, %s38
      %s25 = sphi 0, %s34
      %s26 = sphi 0, %s23
      %s27 = sphi 0, %s24
      %s28 = sphi 0, %s25
      %s29 = sphi 0, %s26
      %s30 = sphi 0, %s27
      %s31 = sphi 0, %s28
      %s47 = sphi 0, %s49
      %s50 = sphi 0, %s47
      %s51 = sphi 0, %s50
      %s67 = sphi 0, %s51
      %s73 = sphi 0, %s75
      %s76 = sphi 0, %s73
      %s77 = sphi 0, %s76
      %s93 = sphi 0, %s77
      %s97 = sphi 0, %s97
      %s99 = sphi 0, %s97
      %s100 = sphi 0, %s99
      %s114 = sphi 0, %s100
      %s118 = sphi 0, %s118
      %s120 = sphi 0, %s118
      %s121 = sphi 0, %s120
      %s135 = sphi 0, %s121
      %s139 = sphi 0, %s139
      %s141 = sphi 0, %s139
      %s142 = sphi 0, %s141
      %s156 = sphi 0, %s142
      %s160 = sphi 0, %s160
      %s162 = sphi 0, %s160
      %s163 = sphi 0, %s162
      %s177 = sphi 0, %s163
      %s185 = sphi 0, %s187
      %s188 = sphi 0, %s185
      %s189 = sphi 0, %s188
      %s205 = sphi 0, %s189
    $region4: #{tpu_custom_call.1} parent=1 // loop_header_branch
      %19 = sbr.rel (%p17) target = $region8
    $region5: #{tpu_custom_call.1} parent=1 // loop_body
      %s21 = ssub.s32 %s16, 1
      %s22 = ssub.s32 %s16, 2
      %s32 = sadd.s32 1, %s25
      %p33 = scmp.ge.s32.totalorder %s32, 1
      %s34 = scalar_select %p33, 0, %s32
      %s35 = sadd.s32 1, %s24
      %s36 = scalar_select %p33, %s35, %s24
      %p37 = scmp.ge.s32.totalorder %s36, 1
      %s38 = scalar_select %p37, 0, %s36
      %s39 = sadd.s32 1, %s23
      %s40 = scalar_select %p37, %s39, %s23
      %p41 = scmp.ge.s32.totalorder %s40, 2
      %s42 = scalar_select %p41, 0, %s40
      %s43 = ssub.s32 %s24, %s38
      %s44 = ssub.s32 %s25, %s34
      %s45 = sor.u32 %s43, %s44
      %p46 = scmp.eq.s32.totalorder %s45, 0
      %s48 = sadd.s32 %s47, 1
      %s49 = scalar_select %p46, %s47, %s48
      %p52 = pneg %p46
      %p53 = scmp.eq.s32.totalorder %s16, 1
      %p54 = por %p52, %p53
      %p55 = scmp.ne.s32.totalorder %s47, %s50
      %p56 = scmp.eq.s32.totalorder %s16, 0
      %p57 = por %p55, %p56
      %p58 = scmp.ne.s32.totalorder %s47, %s50
      %p59 = scmp.eq.s32.totalorder %s21, 1
      %p60 = por %p58, %p59
      %p61 = scmp.ne.s32.totalorder %s50, %s51
      %p62 = scmp.eq.s32.totalorder %s21, 0
      %p63 = por %p61, %p62
      %p64 = scmp.ne.s32.totalorder %s50, %s51
      %p65 = scmp.eq.s32.totalorder %s22, 1
      %p66 = por %p64, %p65
      %p68 = scmp.ne.s32.totalorder %s51, %s67
      %p69 = scmp.eq.s32.totalorder %s22, 0
      %p70 = por %p68, %p69
      %s71 = ssub.s32 %s24, %s38
      %p72 = scmp.eq.s32.totalorder %s71, 0
      %s74 = sadd.s32 %s73, 1
      %s75 = scalar_select %p72, %s73, %s74
      %p78 = pneg %p72
      %p79 = scmp.eq.s32.totalorder %s16, 1
      %p80 = por %p78, %p79
      %p81 = scmp.ne.s32.totalorder %s73, %s76
      %p82 = scmp.eq.s32.totalorder %s16, 0
      %p83 = por %p81, %p82
      %p84 = scmp.ne.s32.totalorder %s73, %s76
      %p85 = scmp.eq.s32.totalorder %s21, 1
      %p86 = por %p84, %p85
      %p87 = scmp.ne.s32.totalorder %s76, %s77
      %p88 = scmp.eq.s32.totalorder %s21, 0
      %p89 = por %p87, %p88
      %p90 = scmp.ne.s32.totalorder %s76, %s77
      %p91 = scmp.eq.s32.totalorder %s22, 1
      %p92 = por %p90, %p91
      %p94 = scmp.ne.s32.totalorder %s77, %s93
      %p95 = scmp.eq.s32.totalorder %s22, 0
      %p96 = por %p94, %p95
      %s98 = sadd.s32 %s97, 1
      %p101 = scmp.eq.s32.totalorder %s16, 1
      %p102 = scmp.ne.s32.totalorder %s97, %s99
      %p103 = scmp.eq.s32.totalorder %s16, 0
      %p104 = por %p102, %p103
      %p105 = scmp.ne.s32.totalorder %s97, %s99
      %p106 = scmp.eq.s32.totalorder %s21, 1
      %p107 = por %p105, %p106
      %p108 = scmp.ne.s32.totalorder %s99, %s100
      %p109 = scmp.eq.s32.totalorder %s21, 0
      %p110 = por %p108, %p109
      %p111 = scmp.ne.s32.totalorder %s99, %s100
      %p112 = scmp.eq.s32.totalorder %s22, 1
      %p113 = por %p111, %p112
      %p115 = scmp.ne.s32.totalorder %s100, %s114
      %p116 = scmp.eq.s32.totalorder %s22, 0
      %p117 = por %p115, %p116
      %s119 = sadd.s32 %s118, 1
      %p122 = scmp.eq.s32.totalorder %s16, 1
      %p123 = scmp.ne.s32.totalorder %s118, %s120
      %p124 = scmp.eq.s32.totalorder %s16, 0
      %p125 = por %p123, %p124
      %p126 = scmp.ne.s32.totalorder %s118, %s120
      %p127 = scmp.eq.s32.totalorder %s21, 1
      %p128 = por %p126, %p127
      %p129 = scmp.ne.s32.totalorder %s120, %s121
      %p130 = scmp.eq.s32.totalorder %s21, 0
      %p131 = por %p129, %p130
      %p132 = scmp.ne.s32.totalorder %s120, %s121
      %p133 = scmp.eq.s32.totalorder %s22, 1
      %p134 = por %p132, %p133
      %p136 = scmp.ne.s32.totalorder %s121, %s135
      %p137 = scmp.eq.s32.totalorder %s22, 0
      %p138 = por %p136, %p137
      %s140 = sadd.s32 %s139, 1
      %p143 = scmp.eq.s32.totalorder %s16, 1
      %p144 = scmp.ne.s32.totalorder %s139, %s141
      %p145 = scmp.eq.s32.totalorder %s16, 0
      %p146 = por %p144, %p145
      %p147 = scmp.ne.s32.totalorder %s139, %s141
      %p148 = scmp.eq.s32.totalorder %s21, 1
      %p149 = por %p147, %p148
      %p150 = scmp.ne.s32.totalorder %s141, %s142
      %p151 = scmp.eq.s32.totalorder %s21, 0
      %p152 = por %p150, %p151
      %p153 = scmp.ne.s32.totalorder %s141, %s142
      %p154 = scmp.eq.s32.totalorder %s22, 1
      %p155 = por %p153, %p154
      %p157 = scmp.ne.s32.totalorder %s142, %s156
      %p158 = scmp.eq.s32.totalorder %s22, 0
      %p159 = por %p157, %p158
      %s161 = sadd.s32 %s160, 1
      %p164 = scmp.eq.s32.totalorder %s16, 1
      %p165 = scmp.ne.s32.totalorder %s160, %s162
      %p166 = scmp.eq.s32.totalorder %s16, 0
      %p167 = por %p165, %p166
      %p168 = scmp.ne.s32.totalorder %s160, %s162
      %p169 = scmp.eq.s32.totalorder %s21, 1
      %p170 = por %p168, %p169
      %p171 = scmp.ne.s32.totalorder %s162, %s163
      %p172 = scmp.eq.s32.totalorder %s21, 0
      %p173 = por %p171, %p172
      %p174 = scmp.ne.s32.totalorder %s162, %s163
      %p175 = scmp.eq.s32.totalorder %s22, 1
      %p176 = por %p174, %p175
      %p178 = scmp.ne.s32.totalorder %s163, %s177
      %p179 = scmp.eq.s32.totalorder %s22, 0
      %p180 = por %p178, %p179
      %s181 = smul.u32 %s24, %s23
      %s182 = smul.u32 %s38, %s42
      %s183 = ssub.s32 %s181, %s182
      %p184 = scmp.eq.s32.totalorder %s183, 0
      %s186 = sadd.s32 %s185, 1
      %s187 = scalar_select %p184, %s185, %s186
      %p190 = pneg %p184
      %p191 = scmp.eq.s32.totalorder %s16, 1
      %p192 = por %p190, %p191
      %p193 = scmp.ne.s32.totalorder %s185, %s188
      %p194 = scmp.eq.s32.totalorder %s16, 0
      %p195 = por %p193, %p194
      %p196 = scmp.ne.s32.totalorder %s185, %s188
      %p197 = scmp.eq.s32.totalorder %s21, 1
      %p198 = por %p196, %p197
      %p199 = scmp.ne.s32.totalorder %s188, %s189
      %p200 = scmp.eq.s32.totalorder %s21, 0
      %p201 = por %p199, %p200
      %p202 = scmp.ne.s32.totalorder %s188, %s189
      %p203 = scmp.eq.s32.totalorder %s22, 1
      %p204 = por %p202, %p203
      %p206 = scmp.ne.s32.totalorder %s189, %s205
      %p207 = scmp.eq.s32.totalorder %s22, 0
      %p208 = por %p206, %p207
      %p209 = scmp.le.s32.totalorder 1, %s16
      %p210 = scmp.lt.s32.totalorder %s16, 3
      %p211 = pnand %p209, %p210
      %p212 = pneg %p211
      // Predicated region
      $region9: #{tpu_custom_call.1} parent=5 // pred_check
        _
      $region10: #{tpu_custom_call.1} parent=5 // pred_check_branch
        %214 = sbr.rel (%p211) target = $region12
      $region11: #{tpu_custom_call.1} parent=5 // pred_region
        %s215 = ssub.s32 %s16, 1
        // Predicated region
        $region13: #{tpu_custom_call.1} parent=11 // pred_check
          %p216 = pneg %p63
        $region14: #{tpu_custom_call.1} parent=11 // pred_check_branch
          %218 = sbr.rel (%p216) target = $region16
        $region15: #{tpu_custom_call.1} parent=11 // pred_region
          %s219 = smul.u32 4, %s27
          %s221 = ssub.s32 512, 512
          %222 = vsyncadd [#allocation5], %s221
          %s223 = sadd.s32 %s28, %s219
          %s224 = smul.addr %s223, 128
          %s225 = scalar_lea.hbm %s0, %s224
          %s226 = sshll.u32 [#allocation4], 4
          %s227 = int_to_ptr.vmem [resolvable:$true] %s226
          %232 = dma.hbm_to_vmem [thread:$0]  %s225, 512, %s227, [#allocation5], 128, 128, 8
        $region16: #{tpu_custom_call.1} parent=11 // pred_fallthru
          _
        // Predicated region
        $region17: #{tpu_custom_call.1} parent=11 // pred_check
          %p233 = pneg %p89
        $region18: #{tpu_custom_call.1} parent=11 // pred_check_branch
          %235 = sbr.rel (%p233) target = $region20
        $region19: #{tpu_custom_call.1} parent=11 // pred_region
          %s236 = smul.u32 16, %s27
          %p237 = scmp.lt.s32.totalorder %s236, 15
          %s238 = scalar_select %p237, %s236, 15
          %s239 = smul.addr %s238, 8
          %s240 = scalar_lea.vmem %s1, %s239
          %s241 = smul.u32 16, %s27
        $region20: #{tpu_custom_call.1} parent=11 // pred_fallthru
          _
        // Predicated region
        $region21: #{tpu_custom_call.1} parent=11 // pred_check
          %p242 = pneg %p110
        $region22: #{tpu_custom_call.1} parent=11 // pred_check_branch
          %244 = sbr.rel (%p242) target = $region24
        $region23: #{tpu_custom_call.1} parent=11 // pred_region
          _
        $region24: #{tpu_custom_call.1} parent=11 // pred_fallthru
          _
        // Predicated region
        $region25: #{tpu_custom_call.1} parent=11 // pred_check
          %p245 = pneg %p131
        $region26: #{tpu_custom_call.1} parent=11 // pred_check_branch
          %247 = sbr.rel (%p245) target = $region28
        $region27: #{tpu_custom_call.1} parent=11 // pred_region
          _
        $region28: #{tpu_custom_call.1} parent=11 // pred_fallthru
          _
        // Predicated region
        $region29: #{tpu_custom_call.1} parent=11 // pred_check
          %p248 = pneg %p152
        $region30: #{tpu_custom_call.1} parent=11 // pred_check_branch
          %250 = sbr.rel (%p248) target = $region32
        $region31: #{tpu_custom_call.1} parent=11 // pred_region
          _
        $region32: #{tpu_custom_call.1} parent=11 // pred_fallthru
          _
        // Predicated region
        $region33: #{tpu_custom_call.1} parent=11 // pred_check
          %p251 = pneg %p173
        $region34: #{tpu_custom_call.1} parent=11 // pred_check_branch
          %253 = sbr.rel (%p251) target = $region36
        $region35: #{tpu_custom_call.1} parent=11 // pred_region
          _
        $region36: #{tpu_custom_call.1} parent=11 // pred_fallthru
          _
      $region12: #{tpu_custom_call.1} parent=5 // pred_fallthru
        _
      %p254 = scmp.lt.s32.totalorder %s16, 2
      // Predicated region
      $region37: #{tpu_custom_call.1} parent=5 // pred_check
        %p255 = pneg %p254
      $region38: #{tpu_custom_call.1} parent=5 // pred_check_branch
        %257 = sbr.rel (%p255) target = $region40
      $region39: #{tpu_custom_call.1} parent=5 // pred_region
        _
      $region40: #{tpu_custom_call.1} parent=5 // pred_fallthru
        _
      %p258 = scmp.le.s32.totalorder 1, %s16
      %p259 = scmp.lt.s32.totalorder %s16, 3
      %p260 = pnand %p258, %p259
      %p261 = pneg %p260
      // Predicated region
      $region41: #{tpu_custom_call.1} parent=5 // pred_check
        _
      $region42: #{tpu_custom_call.1} parent=5 // pred_check_branch
        %263 = sbr.rel (%p260) target = $region44
      $region43: #{tpu_custom_call.1} parent=5 // pred_region
        %s264 = ssub.s32 %s16, 1
        // Predicated region
        $region45: #{tpu_custom_call.1} parent=43 // pred_check
          %p265 = pneg %p63
        $region46: #{tpu_custom_call.1} parent=43 // pred_check_branch
          %267 = sbr.rel (%p265) target = $region48
        $region47: #{tpu_custom_call.1} parent=43 // pred_region
          %268 = dma.done [#allocation5], 512
        $region48: #{tpu_custom_call.1} parent=43 // pred_fallthru
          _
        %p269 = pneg %p63
        %p270 = pneg %p60
        %s271 = smul.u32 16, %s27
        %p272 = scmp.lt.s32.totalorder %s271, 15
        %s273 = scalar_select %p272, %s271, 15
        %s274 = smul.addr %s273, 8
        %s275 = scalar_lea.vmem %s1, %s274
        %p276 = pneg %p89
        %p277 = pneg %p86
        %p278 = pneg %p110
        %p279 = pneg %p107
        %p280 = pneg %p131
        %p281 = pneg %p128
        %p282 = pneg %p152
        %p283 = pneg %p149
        %p284 = pneg %p173
        %p285 = pneg %p170
        %p286 = pneg %p201
        %p287 = pneg %p198
        %s288 = sand.u32 %s188, 1
        %s289 = scalar_lea.sflag [#allocation6], %s288
        %s290 = sand.u32 %s188, 1
        %s291 = smul.addr %s290, 128
        %s292 = scalar_lea.vmem [#allocation7], %s291
        %s293 = smul.u32 4, %s27
        %s294 = smul.u32 16, %s27
        %p295 = scmp.lt.s32.totalorder %s294, 15
        %s296 = scalar_select %p295, %s294, 15
        %s297 = smul.addr %s296, 8
        %s298 = scalar_lea.vmem %s1, %s297
        %s299 = smul.u32 16, %s27
        %s300 = smul.u32 %s27, %s26
        %s301 = smul.u32 16, %s300
        %p303 = scmp.eq.s32.totalorder %s28, 0
        // Predicated region
        $region49: #{tpu_custom_call.1} parent=43 // pred_check
          %p304 = pneg %p303
        $region50: #{tpu_custom_call.1} parent=43 // pred_check_branch
          %306 = sbr.rel (%p304) target = $region52
        $region51: #{tpu_custom_call.1} parent=43 // pred_region
          %307 = vst [vmem:[#allocation3] sm:$0xff] 0.0
          %308 = vst [vmem:[#allocation3 + $0x8] sm:$0xff] 0.0
          %309 = vst [vmem:[#allocation3 + $0x10] sm:$0xff] 0.0
          %310 = vst [vmem:[#allocation3 + $0x18] sm:$0xff] 0.0
          %311 = vst [vmem:[#allocation3 + $0x20] sm:$0xff] 0.0
          %312 = vst [vmem:[#allocation3 + $0x28] sm:$0xff] 0.0
          %313 = vst [vmem:[#allocation3 + $0x30] sm:$0xff] 0.0
          %314 = vst [vmem:[#allocation3 + $0x38] sm:$0xff] 0.0
          %315 = vst [vmem:[#allocation3 + $0x40] sm:$0xff] 0.0
          %316 = vst [vmem:[#allocation3 + $0x48] sm:$0xff] 0.0
          %317 = vst [vmem:[#allocation3 + $0x50] sm:$0xff] 0.0
          %318 = vst [vmem:[#allocation3 + $0x58] sm:$0xff] 0.0
          %319 = vst [vmem:[#allocation3 + $0x60] sm:$0xff] 0.0
          %320 = vst [vmem:[#allocation3 + $0x68] sm:$0xff] 0.0
          %321 = vst [vmem:[#allocation3 + $0x70] sm:$0xff] 0.0
          %322 = vst [vmem:[#allocation3 + $0x78] sm:$0xff] 0.0
        $region52: #{tpu_custom_call.1} parent=43 // pred_fallthru
          _
        %v323 = vld [vmem:[#allocation4] sm:$0xff]
        %v324 = vld [vmem:[#allocation4 + $0x8] sm:$0xff]
        %v325 = vld [vmem:[#allocation4 + $0x10] sm:$0xff]
        %v326 = vld [vmem:[#allocation4 + $0x18] sm:$0xff]
        %v327 = vunpack.c.l.s8.bf16 %v323
        %v328 = vunpack.c.h.s8.bf16 %v323
        %v329 = vunpack.c.l.s8.bf16 %v324
        %v330 = vunpack.c.h.s8.bf16 %v324
        %v331 = vunpack.c.l.s8.bf16 %v325
        %v332 = vunpack.c.h.s8.bf16 %v325
        %v333 = vunpack.c.l.s8.bf16 %v326
        %v334 = vunpack.c.h.s8.bf16 %v326
        %s335 = smul.u32 %s28, 128
        %p336 = scmp.eq.s32.totalorder %s26, 0
        // Predicated region
        $region53: #{tpu_custom_call.1} parent=43 // pred_check
          %p337 = pneg %p336
        $region54: #{tpu_custom_call.1} parent=43 // pred_check_branch
          %339 = sbr.rel (%p337) target = $region56
        $region55: #{tpu_custom_call.1} parent=43 // pred_region
          %v340 = vld [vmem:[#allocation3] sm:$0xff]
          %v341 = vld [vmem:[#allocation3 + $0x8] sm:$0xff]
          %v342 = vld [vmem:[#allocation3 + $0x10] sm:$0xff]
          %v343 = vld [vmem:[#allocation3 + $0x18] sm:$0xff]
          %v344 = vld [vmem:[#allocation3 + $0x20] sm:$0xff]
          %v345 = vld [vmem:[#allocation3 + $0x28] sm:$0xff]
          %v346 = vld [vmem:[#allocation3 + $0x30] sm:$0xff]
          %v347 = vld [vmem:[#allocation3 + $0x38] sm:$0xff]
          %v348 = vld [vmem:[#allocation3 + $0x40] sm:$0xff]
          %v349 = vld [vmem:[#allocation3 + $0x48] sm:$0xff]
          %v350 = vld [vmem:[#allocation3 + $0x50] sm:$0xff]
          %v351 = vld [vmem:[#allocation3 + $0x58] sm:$0xff]
          %v352 = vld [vmem:[#allocation3 + $0x60] sm:$0xff]
          %v353 = vld [vmem:[#allocation3 + $0x68] sm:$0xff]
          %v354 = vld [vmem:[#allocation3 + $0x70] sm:$0xff]
          %v355 = vld [vmem:[#allocation3 + $0x78] sm:$0xff]
          %s356 = sshra.s32 %s335, 3
          %s357 = sand.u32 %s335, 7
          %s358 = smul.addr %s356, 4
          %s359 = scalar_lea.vmem %s2, %s358
          %v360 = vld [vmem:[%s359] sm:$0xf]
          %v361 = vld [vmem:[%s359 + $0x4] sm:$0xf]
          %v362 = vld [vmem:[%s359 + $0x8] sm:$0xf]
          %v363 = vld [vmem:[%s359 + $0xc] sm:$0xf]
          %v364 = vld [vmem:[%s359 + $0x10] sm:$0xf]
          %v365 = vld [vmem:[%s359 + $0x14] sm:$0xf]
          %v366 = vld [vmem:[%s359 + $0x18] sm:$0xf]
          %v367 = vld [vmem:[%s359 + $0x1c] sm:$0xf]
          %v368 = vld [vmem:[%s359 + $0x20] sm:$0xf]
          %v369 = vld [vmem:[%s359 + $0x24] sm:$0xf]
          %v370 = vld [vmem:[%s359 + $0x28] sm:$0xf]
          %v371 = vld [vmem:[%s359 + $0x2c] sm:$0xf]
          %v372 = vld [vmem:[%s359 + $0x30] sm:$0xf]
          %v373 = vld [vmem:[%s359 + $0x34] sm:$0xf]
          %v374 = vld [vmem:[%s359 + $0x38] sm:$0xf]
          %v375 = vld [vmem:[%s359 + $0x3c] sm:$0xf]
          %v392 = vunpack.c.l.b16 %v360
          %v393 = vunpack.c.l.b16 %v361
          %v394 = vunpack.c.l.b16 %v362
          %v395 = vunpack.c.l.b16 %v363
          %v396 = vunpack.c.l.b16 %v364
          %v397 = vunpack.c.l.b16 %v365
          %v398 = vunpack.c.l.b16 %v366
          %v399 = vunpack.c.l.b16 %v367
          %v400 = vunpack.c.l.b16 %v368
          %v401 = vunpack.c.l.b16 %v369
          %v402 = vunpack.c.l.b16 %v370
          %v403 = vunpack.c.l.b16 %v371
          %v404 = vunpack.c.l.b16 %v372
          %v405 = vunpack.c.l.b16 %v373
          %v406 = vunpack.c.l.b16 %v374
          %v407 = vunpack.c.l.b16 %v375
          %v408 = vpack.c.b16 %v393, %v392
          %v409 = vpack.c.b16 %v395, %v394
          %v410 = vpack.c.b16 %v397, %v396
          %v411 = vpack.c.b16 %v399, %v398
          %v412 = vpack.c.b16 %v401, %v400
          %v413 = vpack.c.b16 %v403, %v402
          %v414 = vpack.c.b16 %v405, %v404
          %v415 = vpack.c.b16 %v407, %v406
          %424 = vmatprep.subr.bf16.mxu0 0
          %425 = vmatpush1.bf16.msra.mxu0 %v408
          %426 = vmatprep.subr.bf16.mxu0 0
          %427 = vmatpush1.bf16.msra.mxu0 %v409
          %428 = vmatprep.subr.bf16.mxu0 0
          %429 = vmatpush1.bf16.msra.mxu0 %v410
          %430 = vmatprep.subr.bf16.mxu0 0
          %431 = vmatpush1.bf16.msra.mxu0 %v411
          %432 = vmatprep.subr.bf16.mxu0 0
          %433 = vmatpush1.bf16.msra.mxu0 %v412
          %434 = vmatprep.subr.bf16.mxu0 0
          %435 = vmatpush1.bf16.msra.mxu0 %v413
          %436 = vmatprep.subr.bf16.mxu0 0
          %437 = vmatpush1.bf16.msra.mxu0 %v414
          %438 = vmatprep.subr.bf16.mxu0 0
          %439 = vmatpush1.bf16.msra.mxu0 %v415
          %440 = vmatprep.subr.bf16.mxu0 0
          %441 = vmatpush1.bf16.msra.mxu0 0
          %442 = vmatprep.subr.bf16.mxu0 0
          %443 = vmatpush1.bf16.msra.mxu0 0
          %444 = vmatprep.subr.bf16.mxu0 0
          %445 = vmatpush1.bf16.msra.mxu0 0
          %446 = vmatprep.subr.bf16.mxu0 0
          %447 = vmatpush1.bf16.msra.mxu0 0
          %448 = vmatprep.subr.bf16.mxu0 0
          %449 = vmatpush1.bf16.msra.mxu0 0
          %450 = vmatprep.subr.bf16.mxu0 0
          %451 = vmatpush1.bf16.msra.mxu0 0
          %452 = vmatprep.subr.bf16.mxu0 0
          %453 = vmatpush1.bf16.msra.mxu0 0
          %454 = vmatprep.subr.bf16.mxu0 0
          %455 = vmatpush1.bf16.msra.mxu0 0
          %456 = vmatprep.mubr.bf16.mxu0 0
          %457 = vmatmul.mubr.bf16.gmra.mrb[0].mxu0 %v327
          %v458 = vpop.f32.mrb[0].mxu0
          %v459 = vadd.f32 0.0, %v458
          %v460 = vpop.f32.mrb[0].mxu0
          %v461 = vpop.f32.mrb[0].mxu0
          %v462 = vadd.f32 0.0, %v461
          %v463 = vpop.f32.mrb[0].mxu0
          %464 = vmatprep.mubr.bf16.mxu0 0
          %465 = vmatmul.mubr.bf16.gmra.mrb[0].mxu0 %v328
          %v466 = vpop.f32.mrb[0].mxu0
          %v467 = vadd.f32 0.0, %v466
          %v468 = vpop.f32.mrb[0].mxu0
          %v469 = vpop.f32.mrb[0].mxu0
          %v470 = vadd.f32 0.0, %v469
          %v471 = vpop.f32.mrb[0].mxu0
          %472 = vmatprep.mubr.bf16.mxu0 0
          %473 = vmatmul.mubr.bf16.gmra.mrb[0].mxu0 %v329
          %v474 = vpop.f32.mrb[0].mxu0
          %v475 = vadd.f32 0.0, %v474
          %v476 = vpop.f32.mrb[0].mxu0
          %v477 = vpop.f32.mrb[0].mxu0
          %v478 = vadd.f32 0.0, %v477
          %v479 = vpop.f32.mrb[0].mxu0
          %480 = vmatprep.mubr.bf16.mxu0 0
          %481 = vmatmul.mubr.bf16.gmra.mrb[0].mxu0 %v330
          %v482 = vpop.f32.mrb[0].mxu0
          %v483 = vadd.f32 0.0, %v482
          %v484 = vpop.f32.mrb[0].mxu0
          %v485 = vpop.f32.mrb[0].mxu0
          %v486 = vadd.f32 0.0, %v485
          %v487 = vpop.f32.mrb[0].mxu0
          %488 = vmatprep.mubr.bf16.mxu0 0
          %489 = vmatmul.mubr.bf16.gmra.mrb[0].mxu0 %v331
          %v490 = vpop.f32.mrb[0].mxu0
          %v491 = vadd.f32 0.0, %v490
          %v492 = vpop.f32.mrb[0].mxu0
          %v493 = vpop.f32.mrb[0].mxu0
          %v494 = vadd.f32 0.0, %v493
          %v495 = vpop.f32.mrb[0].mxu0
          %496 = vmatprep.mubr.bf16.mxu0 0
          %497 = vmatmul.mubr.bf16.gmra.mrb[0].mxu0 %v332
          %v498 = vpop.f32.mrb[0].mxu0
          %v499 = vadd.f32 0.0, %v498
          %v500 = vpop.f32.mrb[0].mxu0
          %v501 = vpop.f32.mrb[0].mxu0
          %v502 = vadd.f32 0.0, %v501
          %v503 = vpop.f32.mrb[0].mxu0
          %504 = vmatprep.mubr.bf16.mxu0 0
          %505 = vmatmul.mubr.bf16.gmra.mrb[0].mxu0 %v333
          %v506 = vpop.f32.mrb[0].mxu0
          %v507 = vadd.f32 0.0, %v506
          %v508 = vpop.f32.mrb[0].mxu0
          %v509 = vpop.f32.mrb[0].mxu0
          %v510 = vadd.f32 0.0, %v509
          %v511 = vpop.f32.mrb[0].mxu0
          %512 = vmatprep.mubr.bf16.mxu0 0
          %513 = vmatmul.mubr.bf16.gmra.mrb[0].mxu0 %v334
          %v514 = vpop.f32.mrb[0].mxu0
          %v515 = vadd.f32 0.0, %v514
          %v516 = vpop.f32.mrb[0].mxu0
          %v517 = vpop.f32.mrb[0].mxu0
          %v518 = vadd.f32 0.0, %v517
          %v519 = vpop.f32.mrb[0].mxu0
          %520 = vdwg.mxu0
          %v521 = vadd.f32 %v340, %v459
          %v522 = vadd.f32 %v341, %v462
          %v523 = vadd.f32 %v342, %v467
          %v524 = vadd.f32 %v343, %v470
          %v525 = vadd.f32 %v344, %v475
          %v526 = vadd.f32 %v345, %v478
          %v527 = vadd.f32 %v346, %v483
          %v528 = vadd.f32 %v347, %v486
          %v529 = vadd.f32 %v348, %v491
          %v530 = vadd.f32 %v349, %v494
          %v531 = vadd.f32 %v350, %v499
          %v532 = vadd.f32 %v351, %v502
          %v533 = vadd.f32 %v352, %v507
          %v534 = vadd.f32 %v353, %v510
          %v535 = vadd.f32 %v354, %v515
          %v536 = vadd.f32 %v355, %v518
          %537 = vst [vmem:[#allocation3] sm:$0xff] %v521
          %538 = vst [vmem:[#allocation3 + $0x8] sm:$0xff] %v522
          %539 = vst [vmem:[#allocation3 + $0x10] sm:$0xff] %v523
          %540 = vst [vmem:[#allocation3 + $0x18] sm:$0xff] %v524
          %541 = vst [vmem:[#allocation3 + $0x20] sm:$0xff] %v525
          %542 = vst [vmem:[#allocation3 + $0x28] sm:$0xff] %v526
          %543 = vst [vmem:[#allocation3 + $0x30] sm:$0xff] %v527
          %544 = vst [vmem:[#allocation3 + $0x38] sm:$0xff] %v528
          %545 = vst [vmem:[#allocation3 + $0x40] sm:$0xff] %v529
          %546 = vst [vmem:[#allocation3 + $0x48] sm:$0xff] %v530
          %547 = vst [vmem:[#allocation3 + $0x50] sm:$0xff] %v531
          %548 = vst [vmem:[#allocation3 + $0x58] sm:$0xff] %v532
          %549 = vst [vmem:[#allocation3 + $0x60] sm:$0xff] %v533
          %550 = vst [vmem:[#allocation3 + $0x68] sm:$0xff] %v534
          %551 = vst [vmem:[#allocation3 + $0x70] sm:$0xff] %v535
          %552 = vst [vmem:[#allocation3 + $0x78] sm:$0xff] %v536
        $region56: #{tpu_custom_call.1} parent=43 // pred_fallthru
          _
        %p553 = scmp.eq.s32.totalorder %s26, 1
        // Predicated region
        $region57: #{tpu_custom_call.1} parent=43 // pred_check
          %p554 = pneg %p553
        $region58: #{tpu_custom_call.1} parent=43 // pred_check_branch
          %556 = sbr.rel (%p554) target = $region60
        $region59: #{tpu_custom_call.1} parent=43 // pred_region
          %v557 = vld [vmem:[#allocation3] sm:$0xff]
          %v558 = vld [vmem:[#allocation3 + $0x8] sm:$0xff]
          %v559 = vld [vmem:[#allocation3 + $0x10] sm:$0xff]
          %v560 = vld [vmem:[#allocation3 + $0x18] sm:$0xff]
          %v561 = vld [vmem:[#allocation3 + $0x20] sm:$0xff]
          %v562 = vld [vmem:[#allocation3 + $0x28] sm:$0xff]
          %v563 = vld [vmem:[#allocation3 + $0x30] sm:$0xff]
          %v564 = vld [vmem:[#allocation3 + $0x38] sm:$0xff]
          %v565 = vld [vmem:[#allocation3 + $0x40] sm:$0xff]
          %v566 = vld [vmem:[#allocation3 + $0x48] sm:$0xff]
          %v567 = vld [vmem:[#allocation3 + $0x50] sm:$0xff]
          %v568 = vld [vmem:[#allocation3 + $0x58] sm:$0xff]
          %v569 = vld [vmem:[#allocation3 + $0x60] sm:$0xff]
          %v570 = vld [vmem:[#allocation3 + $0x68] sm:$0xff]
          %v571 = vld [vmem:[#allocation3 + $0x70] sm:$0xff]
          %v572 = vld [vmem:[#allocation3 + $0x78] sm:$0xff]
          %s573 = sshra.s32 %s335, 4
          %s574 = sand.u32 %s335, 15
          %s575 = smul.addr %s573, 8
          %s576 = scalar_lea.vmem [#allocation2], %s575
          %v577 = vld [vmem:[%s576] sm:$0xff]
          %v578 = vld [vmem:[%s576 + $0x8] sm:$0xff]
          %v579 = vld [vmem:[%s576 + $0x10] sm:$0xff]
          %v580 = vld [vmem:[%s576 + $0x18] sm:$0xff]
          %v581 = vld [vmem:[%s576 + $0x20] sm:$0xff]
          %v582 = vld [vmem:[%s576 + $0x28] sm:$0xff]
          %v583 = vld [vmem:[%s576 + $0x30] sm:$0xff]
          %v584 = vld [vmem:[%s576 + $0x38] sm:$0xff]
          %585 = vmatprep.subr.bf16.mxu0 0
          %586 = vmatpush1.bf16.msra.mxu0 %v577
          %587 = vmatprep.subr.bf16.mxu0 0
          %588 = vmatpush1.bf16.msra.mxu0 %v578
          %589 = vmatprep.subr.bf16.mxu0 0
          %590 = vmatpush1.bf16.msra.mxu0 %v579
          %591 = vmatprep.subr.bf16.mxu0 0
          %592 = vmatpush1.bf16.msra.mxu0 %v580
          %593 = vmatprep.subr.bf16.mxu0 0
          %594 = vmatpush1.bf16.msra.mxu0 %v581
          %595 = vmatprep.subr.bf16.mxu0 0
          %596 = vmatpush1.bf16.msra.mxu0 %v582
          %597 = vmatprep.subr.bf16.mxu0 0
          %598 = vmatpush1.bf16.msra.mxu0 %v583
          %599 = vmatprep.subr.bf16.mxu0 0
          %600 = vmatpush1.bf16.msra.mxu0 %v584
          %601 = vmatprep.subr.bf16.mxu0 0
          %602 = vmatpush1.bf16.msra.mxu0 0
          %603 = vmatprep.subr.bf16.mxu0 0
          %604 = vmatpush1.bf16.msra.mxu0 0
          %605 = vmatprep.subr.bf16.mxu0 0
          %606 = vmatpush1.bf16.msra.mxu0 0
          %607 = vmatprep.subr.bf16.mxu0 0
          %608 = vmatpush1.bf16.msra.mxu0 0
          %609 = vmatprep.subr.bf16.mxu0 0
          %610 = vmatpush1.bf16.msra.mxu0 0
          %611 = vmatprep.subr.bf16.mxu0 0
          %612 = vmatpush1.bf16.msra.mxu0 0
          %613 = vmatprep.subr.bf16.mxu0 0
          %614 = vmatpush1.bf16.msra.mxu0 0
          %615 = vmatprep.subr.bf16.mxu0 0
          %616 = vmatpush1.bf16.msra.mxu0 0
          %617 = vmatprep.mubr.bf16.mxu0 0
          %618 = vmatmul.mubr.bf16.gmra.mrb[0].mxu0 %v327
          %v619 = vpop.f32.mrb[0].mxu0
          %v620 = vadd.f32 0.0, %v619
          %v621 = vpop.f32.mrb[0].mxu0
          %v622 = vpop.f32.mrb[0].mxu0
          %v623 = vadd.f32 0.0, %v622
          %v624 = vpop.f32.mrb[0].mxu0
          %625 = vmatprep.mubr.bf16.mxu0 0
          %626 = vmatmul.mubr.bf16.gmra.mrb[0].mxu0 %v328
          %v627 = vpop.f32.mrb[0].mxu0
          %v628 = vadd.f32 0.0, %v627
          %v629 = vpop.f32.mrb[0].mxu0
          %v630 = vpop.f32.mrb[0].mxu0
          %v631 = vadd.f32 0.0, %v630
          %v632 = vpop.f32.mrb[0].mxu0
          %633 = vmatprep.mubr.bf16.mxu0 0
          %634 = vmatmul.mubr.bf16.gmra.mrb[0].mxu0 %v329
          %v635 = vpop.f32.mrb[0].mxu0
          %v636 = vadd.f32 0.0, %v635
          %v637 = vpop.f32.mrb[0].mxu0
          %v638 = vpop.f32.mrb[0].mxu0
          %v639 = vadd.f32 0.0, %v638
          %v640 = vpop.f32.mrb[0].mxu0
          %641 = vmatprep.mubr.bf16.mxu0 0
          %642 = vmatmul.mubr.bf16.gmra.mrb[0].mxu0 %v330
          %v643 = vpop.f32.mrb[0].mxu0
          %v644 = vadd.f32 0.0, %v643
          %v645 = vpop.f32.mrb[0].mxu0
          %v646 = vpop.f32.mrb[0].mxu0
          %v647 = vadd.f32 0.0, %v646
          %v648 = vpop.f32.mrb[0].mxu0
          %649 = vmatprep.mubr.bf16.mxu0 0
          %650 = vmatmul.mubr.bf16.gmra.mrb[0].mxu0 %v331
          %v651 = vpop.f32.mrb[0].mxu0
          %v652 = vadd.f32 0.0, %v651
          %v653 = vpop.f32.mrb[0].mxu0
          %v654 = vpop.f32.mrb[0].mxu0
          %v655 = vadd.f32 0.0, %v654
          %v656 = vpop.f32.mrb[0].mxu0
          %657 = vmatprep.mubr.bf16.mxu0 0
          %658 = vmatmul.mubr.bf16.gmra.mrb[0].mxu0 %v332
          %v659 = vpop.f32.mrb[0].mxu0
          %v660 = vadd.f32 0.0, %v659
          %v661 = vpop.f32.mrb[0].mxu0
          %v662 = vpop.f32.mrb[0].mxu0
          %v663 = vadd.f32 0.0, %v662
          %v664 = vpop.f32.mrb[0].mxu0
          %665 = vmatprep.mubr.bf16.mxu0 0
          %666 = vmatmul.mubr.bf16.gmra.mrb[0].mxu0 %v333
          %v667 = vpop.f32.mrb[0].mxu0
          %v668 = vadd.f32 0.0, %v667
          %v669 = vpop.f32.mrb[0].mxu0
          %v670 = vpop.f32.mrb[0].mxu0
          %v671 = vadd.f32 0.0, %v670
          %v672 = vpop.f32.mrb[0].mxu0
          %673 = vmatprep.mubr.bf16.mxu0 0
          %674 = vmatmul.mubr.bf16.gmra.mrb[0].mxu0 %v334
          %v675 = vpop.f32.mrb[0].mxu0
          %v676 = vadd.f32 0.0, %v675
          %v677 = vpop.f32.mrb[0].mxu0
          %v678 = vpop.f32.mrb[0].mxu0
          %v679 = vadd.f32 0.0, %v678
          %v680 = vpop.f32.mrb[0].mxu0
          %681 = vdwg.mxu0
          %v682 = vadd.f32 %v557, %v620
          %v683 = vadd.f32 %v558, %v623
          %v684 = vadd.f32 %v559, %v628
          %v685 = vadd.f32 %v560, %v631
          %v686 = vadd.f32 %v561, %v636
          %v687 = vadd.f32 %v562, %v639
          %v688 = vadd.f32 %v563, %v644
          %v689 = vadd.f32 %v564, %v647
          %v690 = vadd.f32 %v565, %v652
          %v691 = vadd.f32 %v566, %v655
          %v692 = vadd.f32 %v567, %v660
          %v693 = vadd.f32 %v568, %v663
          %v694 = vadd.f32 %v569, %v668
          %v695 = vadd.f32 %v570, %v671
          %v696 = vadd.f32 %v571, %v676
          %v697 = vadd.f32 %v572, %v679
          %698 = vst [vmem:[#allocation3] sm:$0xff] %v682
          %699 = vst [vmem:[#allocation3 + $0x8] sm:$0xff] %v683
          %700 = vst [vmem:[#allocation3 + $0x10] sm:$0xff] %v684
          %701 = vst [vmem:[#allocation3 + $0x18] sm:$0xff] %v685
          %702 = vst [vmem:[#allocation3 + $0x20] sm:$0xff] %v686
          %703 = vst [vmem:[#allocation3 + $0x28] sm:$0xff] %v687
          %704 = vst [vmem:[#allocation3 + $0x30] sm:$0xff] %v688
          %705 = vst [vmem:[#allocation3 + $0x38] sm:$0xff] %v689
          %706 = vst [vmem:[#allocation3 + $0x40] sm:$0xff] %v690
          %707 = vst [vmem:[#allocation3 + $0x48] sm:$0xff] %v691
          %708 = vst [vmem:[#allocation3 + $0x50] sm:$0xff] %v692
          %709 = vst [vmem:[#allocation3 + $0x58] sm:$0xff] %v693
          %710 = vst [vmem:[#allocation3 + $0x60] sm:$0xff] %v694
          %711 = vst [vmem:[#allocation3 + $0x68] sm:$0xff] %v695
          %712 = vst [vmem:[#allocation3 + $0x70] sm:$0xff] %v696
          %713 = vst [vmem:[#allocation3 + $0x78] sm:$0xff] %v697
        $region60: #{tpu_custom_call.1} parent=43 // pred_fallthru
          _
        %p714 = pnand %p336, %p303
        %p715 = pneg %p714
        // Predicated region
        $region61: #{tpu_custom_call.1} parent=43 // pred_check
          _
        $region62: #{tpu_custom_call.1} parent=43 // pred_check_branch
          %717 = sbr.rel (%p714) target = $region64
        $region63: #{tpu_custom_call.1} parent=43 // pred_region
          %v718 = vld [vmem:[#allocation3] sm:$0xff]
          %v719 = vld [vmem:[#allocation3 + $0x8] sm:$0xff]
          %v720 = vld [vmem:[#allocation3 + $0x10] sm:$0xff]
          %v721 = vld [vmem:[#allocation3 + $0x18] sm:$0xff]
          %v722 = vld [vmem:[#allocation3 + $0x20] sm:$0xff]
          %v723 = vld [vmem:[#allocation3 + $0x28] sm:$0xff]
          %v724 = vld [vmem:[#allocation3 + $0x30] sm:$0xff]
          %v725 = vld [vmem:[#allocation3 + $0x38] sm:$0xff]
          %v726 = vld [vmem:[#allocation3 + $0x40] sm:$0xff]
          %v727 = vld [vmem:[#allocation3 + $0x48] sm:$0xff]
          %v728 = vld [vmem:[#allocation3 + $0x50] sm:$0xff]
          %v729 = vld [vmem:[#allocation3 + $0x58] sm:$0xff]
          %v730 = vld [vmem:[#allocation3 + $0x60] sm:$0xff]
          %v731 = vld [vmem:[#allocation3 + $0x68] sm:$0xff]
          %v732 = vld [vmem:[#allocation3 + $0x70] sm:$0xff]
          %v733 = vld [vmem:[#allocation3 + $0x78] sm:$0xff]
          %v734 = vld [vmem:[%s298] sm:$0xff]
          %v735 = vld [vmem:[%s298 + $0x8] sm:$0xff]
          %v736 = vld [vmem:[%s298 + $0x10] sm:$0xff]
          %v737 = vld [vmem:[%s298 + $0x18] sm:$0xff]
          %v738 = vld [vmem:[%s298 + $0x20] sm:$0xff]
          %v739 = vld [vmem:[%s298 + $0x28] sm:$0xff]
          %v740 = vld [vmem:[%s298 + $0x30] sm:$0xff]
          %v741 = vld [vmem:[%s298 + $0x38] sm:$0xff]
          %v742 = vld [vmem:[%s298 + $0x40] sm:$0xff]
          %v743 = vld [vmem:[%s298 + $0x48] sm:$0xff]
          %v744 = vld [vmem:[%s298 + $0x50] sm:$0xff]
          %v745 = vld [vmem:[%s298 + $0x58] sm:$0xff]
          %v746 = vld [vmem:[%s298 + $0x60] sm:$0xff]
          %v747 = vld [vmem:[%s298 + $0x68] sm:$0xff]
          %v748 = vld [vmem:[%s298 + $0x70] sm:$0xff]
          %v749 = vld [vmem:[%s298 + $0x78] sm:$0xff]
          %751 = vset.pattern.permute.xlu0 0
          %752 = vperm.xlu0 %751, %v734
          %v753 = vpop.permute.xlu0 %752
          %756 = vset.pattern.permute.xlu0 0
          %757 = vperm.xlu0 %756, %v735
          %v758 = vpop.permute.xlu0 %757
          %761 = vset.pattern.permute.xlu0 0
          %762 = vperm.xlu0 %761, %v736
          %v763 = vpop.permute.xlu0 %762
          %766 = vset.pattern.permute.xlu0 0
          %767 = vperm.xlu0 %766, %v737
          %v768 = vpop.permute.xlu0 %767
          %771 = vset.pattern.permute.xlu0 0
          %772 = vperm.xlu0 %771, %v738
          %v773 = vpop.permute.xlu0 %772
          %776 = vset.pattern.permute.xlu0 0
          %777 = vperm.xlu0 %776, %v739
          %v778 = vpop.permute.xlu0 %777
          %781 = vset.pattern.permute.xlu0 0
          %782 = vperm.xlu0 %781, %v740
          %v783 = vpop.permute.xlu0 %782
          %786 = vset.pattern.permute.xlu0 0
          %787 = vperm.xlu0 %786, %v741
          %v788 = vpop.permute.xlu0 %787
          %791 = vset.pattern.permute.xlu0 0
          %792 = vperm.xlu0 %791, %v742
          %v793 = vpop.permute.xlu0 %792
          %796 = vset.pattern.permute.xlu0 0
          %797 = vperm.xlu0 %796, %v743
          %v798 = vpop.permute.xlu0 %797
          %801 = vset.pattern.permute.xlu0 0
          %802 = vperm.xlu0 %801, %v744
          %v803 = vpop.permute.xlu0 %802
          %806 = vset.pattern.permute.xlu0 0
          %807 = vperm.xlu0 %806, %v745
          %v808 = vpop.permute.xlu0 %807
          %811 = vset.pattern.permute.xlu0 0
          %812 = vperm.xlu0 %811, %v746
          %v813 = vpop.permute.xlu0 %812
          %816 = vset.pattern.permute.xlu0 0
          %817 = vperm.xlu0 %816, %v747
          %v818 = vpop.permute.xlu0 %817
          %821 = vset.pattern.permute.xlu0 0
          %822 = vperm.xlu0 %821, %v748
          %v823 = vpop.permute.xlu0 %822
          %826 = vset.pattern.permute.xlu0 0
          %827 = vperm.xlu0 %826, %v749
          %v828 = vpop.permute.xlu0 %827
          %v830 = vmul.f32 %v718, %v753
          %v831 = vmul.f32 %v719, %v758
          %v832 = vmul.f32 %v720, %v763
          %v833 = vmul.f32 %v721, %v768
          %v834 = vmul.f32 %v722, %v773
          %v835 = vmul.f32 %v723, %v778
          %v836 = vmul.f32 %v724, %v783
          %v837 = vmul.f32 %v725, %v788
          %v838 = vmul.f32 %v726, %v793
          %v839 = vmul.f32 %v727, %v798
          %v840 = vmul.f32 %v728, %v803
          %v841 = vmul.f32 %v729, %v808
          %v842 = vmul.f32 %v730, %v813
          %v843 = vmul.f32 %v731, %v818
          %v844 = vmul.f32 %v732, %v823
          %v845 = vmul.f32 %v733, %v828
          %v846 = vld [vmem:[%s3] sm:$0x1]
          %v848 = vlaneseq
          %v849 = vshrl.u32 %v848, 7
          %v850 = vsub.s32 0, %v849
          %v851 = vrot.slane %v846, %v850
          %v853 = vadd.f32 %v830, %v851
          %v854 = vadd.f32 %v831, %v851
          %v855 = vadd.f32 %v832, %v851
          %v856 = vadd.f32 %v833, %v851
          %v857 = vadd.f32 %v834, %v851
          %v858 = vadd.f32 %v835, %v851
          %v859 = vadd.f32 %v836, %v851
          %v860 = vadd.f32 %v837, %v851
          %v861 = vadd.f32 %v838, %v851
          %v862 = vadd.f32 %v839, %v851
          %v863 = vadd.f32 %v840, %v851
          %v864 = vadd.f32 %v841, %v851
          %v865 = vadd.f32 %v842, %v851
          %v866 = vadd.f32 %v843, %v851
          %v867 = vadd.f32 %v844, %v851
          %v868 = vadd.f32 %v845, %v851
          %v869 = vmax.f32 %v853, 0.0
          %v870 = vmax.f32 %v854, 0.0
          %v871 = vmax.f32 %v855, 0.0
          %v872 = vmax.f32 %v856, 0.0
          %v873 = vmax.f32 %v857, 0.0
          %v874 = vmax.f32 %v858, 0.0
          %v875 = vmax.f32 %v859, 0.0
          %v876 = vmax.f32 %v860, 0.0
          %v877 = vmax.f32 %v861, 0.0
          %v878 = vmax.f32 %v862, 0.0
          %v879 = vmax.f32 %v863, 0.0
          %v880 = vmax.f32 %v864, 0.0
          %v881 = vmax.f32 %v865, 0.0
          %v882 = vmax.f32 %v866, 0.0
          %v883 = vmax.f32 %v867, 0.0
          %v884 = vmax.f32 %v868, 0.0
          %v885 = vpack.c.bf16 %v870, %v869
          %v886 = vpack.c.bf16 %v872, %v871
          %v887 = vpack.c.bf16 %v874, %v873
          %v888 = vpack.c.bf16 %v876, %v875
          %v889 = vpack.c.bf16 %v878, %v877
          %v890 = vpack.c.bf16 %v880, %v879
          %v891 = vpack.c.bf16 %v882, %v881
          %v892 = vpack.c.bf16 %v884, %v883
          %v893 = vld [vmem:[%s4] sm:$0xf]
          %v894 = vld [vmem:[%s4 + $0x4] sm:$0xf]
          %v895 = vld [vmem:[%s4 + $0x8] sm:$0xf]
          %v896 = vld [vmem:[%s4 + $0xc] sm:$0xf]
          %v897 = vld [vmem:[%s4 + $0x10] sm:$0xf]
          %v898 = vld [vmem:[%s4 + $0x14] sm:$0xf]
          %v899 = vld [vmem:[%s4 + $0x18] sm:$0xf]
          %v900 = vld [vmem:[%s4 + $0x1c] sm:$0xf]
          %v901 = vld [vmem:[%s4 + $0x20] sm:$0xf]
          %v902 = vld [vmem:[%s4 + $0x24] sm:$0xf]
          %v903 = vld [vmem:[%s4 + $0x28] sm:$0xf]
          %v904 = vld [vmem:[%s4 + $0x2c] sm:$0xf]
          %v905 = vld [vmem:[%s4 + $0x30] sm:$0xf]
          %v906 = vld [vmem:[%s4 + $0x34] sm:$0xf]
          %v907 = vld [vmem:[%s4 + $0x38] sm:$0xf]
          %v908 = vld [vmem:[%s4 + $0x3c] sm:$0xf]
          %v925 = vunpack.c.l.b16 %v893
          %v926 = vunpack.c.l.b16 %v894
          %v927 = vunpack.c.l.b16 %v895
          %v928 = vunpack.c.l.b16 %v896
          %v929 = vunpack.c.l.b16 %v897
          %v930 = vunpack.c.l.b16 %v898
          %v931 = vunpack.c.l.b16 %v899
          %v932 = vunpack.c.l.b16 %v900
          %v933 = vunpack.c.l.b16 %v901
          %v934 = vunpack.c.l.b16 %v902
          %v935 = vunpack.c.l.b16 %v903
          %v936 = vunpack.c.l.b16 %v904
          %v937 = vunpack.c.l.b16 %v905
          %v938 = vunpack.c.l.b16 %v906
          %v939 = vunpack.c.l.b16 %v907
          %v940 = vunpack.c.l.b16 %v908
          %v941 = vpack.c.b16 %v926, %v925
          %v942 = vpack.c.b16 %v928, %v927
          %v943 = vpack.c.b16 %v930, %v929
          %v944 = vpack.c.b16 %v932, %v931
          %v945 = vpack.c.b16 %v934, %v933
          %v946 = vpack.c.b16 %v936, %v935
          %v947 = vpack.c.b16 %v938, %v937
          %v948 = vpack.c.b16 %v940, %v939
          %957 = vmatprep.subr.bf16.mxu0 0
          %958 = vmatpush1.bf16.msra.mxu0 %v941
          %959 = vmatprep.subr.bf16.mxu0 0
          %960 = vmatpush1.bf16.msra.mxu0 %v942
          %961 = vmatprep.subr.bf16.mxu0 0
          %962 = vmatpush1.bf16.msra.mxu0 %v943
          %963 = vmatprep.subr.bf16.mxu0 0
          %964 = vmatpush1.bf16.msra.mxu0 %v944
          %965 = vmatprep.subr.bf16.mxu0 0
          %966 = vmatpush1.bf16.msra.mxu0 %v945
          %967 = vmatprep.subr.bf16.mxu0 0
          %968 = vmatpush1.bf16.msra.mxu0 %v946
          %969 = vmatprep.subr.bf16.mxu0 0
          %970 = vmatpush1.bf16.msra.mxu0 %v947
          %971 = vmatprep.subr.bf16.mxu0 0
          %972 = vmatpush1.bf16.msra.mxu0 %v948
          %973 = vmatprep.subr.bf16.mxu0 0
          %974 = vmatpush1.bf16.msra.mxu0 0
          %975 = vmatprep.subr.bf16.mxu0 0
          %976 = vmatpush1.bf16.msra.mxu0 0
          %977 = vmatprep.subr.bf16.mxu0 0
          %978 = vmatpush1.bf16.msra.mxu0 0
          %979 = vmatprep.subr.bf16.mxu0 0
          %980 = vmatpush1.bf16.msra.mxu0 0
          %981 = vmatprep.subr.bf16.mxu0 0
          %982 = vmatpush1.bf16.msra.mxu0 0
          %983 = vmatprep.subr.bf16.mxu0 0
          %984 = vmatpush1.bf16.msra.mxu0 0
          %985 = vmatprep.subr.bf16.mxu0 0
          %986 = vmatpush1.bf16.msra.mxu0 0
          %987 = vmatprep.subr.bf16.mxu0 0
          %988 = vmatpush1.bf16.msra.mxu0 0
          %989 = vmatprep.mubr.bf16.mxu0 0
          %990 = vmatmul.mubr.bf16.gmra.mrb[0].mxu0 %v885
          %v991 = vpop.f32.mrb[0].mxu0
          %v992 = vadd.f32 0.0, %v991
          %v993 = vpop.f32.mrb[0].mxu0
          %v994 = vpop.f32.mrb[0].mxu0
          %v995 = vadd.f32 0.0, %v994
          %v996 = vpop.f32.mrb[0].mxu0
          %997 = vmatprep.mubr.bf16.mxu0 0
          %998 = vmatmul.mubr.bf16.gmra.mrb[0].mxu0 %v886
          %v999 = vpop.f32.mrb[0].mxu0
          %v1000 = vadd.f32 0.0, %v999
          %v1001 = vpop.f32.mrb[0].mxu0
          %v1002 = vpop.f32.mrb[0].mxu0
          %v1003 = vadd.f32 0.0, %v1002
          %v1004 = vpop.f32.mrb[0].mxu0
          %1005 = vmatprep.mubr.bf16.mxu0 0
          %1006 = vmatmul.mubr.bf16.gmra.mrb[0].mxu0 %v887
          %v1007 = vpop.f32.mrb[0].mxu0
          %v1008 = vadd.f32 0.0, %v1007
          %v1009 = vpop.f32.mrb[0].mxu0
          %v1010 = vpop.f32.mrb[0].mxu0
          %v1011 = vadd.f32 0.0, %v1010
          %v1012 = vpop.f32.mrb[0].mxu0
          %1013 = vmatprep.mubr.bf16.mxu0 0
          %1014 = vmatmul.mubr.bf16.gmra.mrb[0].mxu0 %v888
          %v1015 = vpop.f32.mrb[0].mxu0
          %v1016 = vadd.f32 0.0, %v1015
          %v1017 = vpop.f32.mrb[0].mxu0
          %v1018 = vpop.f32.mrb[0].mxu0
          %v1019 = vadd.f32 0.0, %v1018
          %v1020 = vpop.f32.mrb[0].mxu0
          %1021 = vmatprep.mubr.bf16.mxu0 0
          %1022 = vmatmul.mubr.bf16.gmra.mrb[0].mxu0 %v889
          %v1023 = vpop.f32.mrb[0].mxu0
          %v1024 = vadd.f32 0.0, %v1023
          %v1025 = vpop.f32.mrb[0].mxu0
          %v1026 = vpop.f32.mrb[0].mxu0
          %v1027 = vadd.f32 0.0, %v1026
          %v1028 = vpop.f32.mrb[0].mxu0
          %1029 = vmatprep.mubr.bf16.mxu0 0
          %1030 = vmatmul.mubr.bf16.gmra.mrb[0].mxu0 %v890
          %v1031 = vpop.f32.mrb[0].mxu0
          %v1032 = vadd.f32 0.0, %v1031
          %v1033 = vpop.f32.mrb[0].mxu0
          %v1034 = vpop.f32.mrb[0].mxu0
          %v1035 = vadd.f32 0.0, %v1034
          %v1036 = vpop.f32.mrb[0].mxu0
          %1037 = vmatprep.mubr.bf16.mxu0 0
          %1038 = vmatmul.mubr.bf16.gmra.mrb[0].mxu0 %v891
          %v1039 = vpop.f32.mrb[0].mxu0
          %v1040 = vadd.f32 0.0, %v1039
          %v1041 = vpop.f32.mrb[0].mxu0
          %v1042 = vpop.f32.mrb[0].mxu0
          %v1043 = vadd.f32 0.0, %v1042
          %v1044 = vpop.f32.mrb[0].mxu0
          %1045 = vmatprep.mubr.bf16.mxu0 0
          %1046 = vmatmul.mubr.bf16.gmra.mrb[0].mxu0 %v892
          %v1047 = vpop.f32.mrb[0].mxu0
          %v1048 = vadd.f32 0.0, %v1047
          %v1049 = vpop.f32.mrb[0].mxu0
          %v1050 = vpop.f32.mrb[0].mxu0
          %v1051 = vadd.f32 0.0, %v1050
          %v1052 = vpop.f32.mrb[0].mxu0
          %1053 = vdwg.mxu0
          %s1054 = smul.u32 %s27, 128
          %v1055 = vpack.c.bf16 %v995, %v992
          %v1056 = vpack.c.bf16 %v1003, %v1000
          %v1057 = vpack.c.bf16 %v1011, %v1008
          %v1058 = vpack.c.bf16 %v1019, %v1016
          %v1059 = vpack.c.bf16 %v1027, %v1024
          %v1060 = vpack.c.bf16 %v1035, %v1032
          %v1061 = vpack.c.bf16 %v1043, %v1040
          %v1062 = vpack.c.bf16 %v1051, %v1048
          %s1063 = sshra.s32 %s1054, 4
          %s1064 = sand.u32 %s1054, 15
          %s1065 = smul.addr %s1063, 8
          %s1066 = scalar_lea.vmem [#allocation2], %s1065
          %1067 = vst [vmem:[%s1066] sm:$0xff] %v1055
          %1068 = vst [vmem:[%s1066 + $0x8] sm:$0xff] %v1056
          %1069 = vst [vmem:[%s1066 + $0x10] sm:$0xff] %v1057
          %1070 = vst [vmem:[%s1066 + $0x18] sm:$0xff] %v1058
          %1071 = vst [vmem:[%s1066 + $0x20] sm:$0xff] %v1059
          %1072 = vst [vmem:[%s1066 + $0x28] sm:$0xff] %v1060
          %1073 = vst [vmem:[%s1066 + $0x30] sm:$0xff] %v1061
          %1074 = vst [vmem:[%s1066 + $0x38] sm:$0xff] %v1062
        $region64: #{tpu_custom_call.1} parent=43 // pred_fallthru
          _
        %p1075 = pnand %p553, %p303
        %p1076 = pneg %p1075
        // Predicated region
        $region65: #{tpu_custom_call.1} parent=43 // pred_check
          _
        $region66: #{tpu_custom_call.1} parent=43 // pred_check_branch
          %1078 = sbr.rel (%p1075) target = $region68
        $region67: #{tpu_custom_call.1} parent=43 // pred_region
          %v1079 = vld [vmem:[#allocation3] sm:$0xff]
          %v1080 = vld [vmem:[#allocation3 + $0x8] sm:$0xff]
          %v1081 = vld [vmem:[#allocation3 + $0x10] sm:$0xff]
          %v1082 = vld [vmem:[#allocation3 + $0x18] sm:$0xff]
          %v1083 = vld [vmem:[#allocation3 + $0x20] sm:$0xff]
          %v1084 = vld [vmem:[#allocation3 + $0x28] sm:$0xff]
          %v1085 = vld [vmem:[#allocation3 + $0x30] sm:$0xff]
          %v1086 = vld [vmem:[#allocation3 + $0x38] sm:$0xff]
          %v1087 = vld [vmem:[#allocation3 + $0x40] sm:$0xff]
          %v1088 = vld [vmem:[#allocation3 + $0x48] sm:$0xff]
          %v1089 = vld [vmem:[#allocation3 + $0x50] sm:$0xff]
          %v1090 = vld [vmem:[#allocation3 + $0x58] sm:$0xff]
          %v1091 = vld [vmem:[#allocation3 + $0x60] sm:$0xff]
          %v1092 = vld [vmem:[#allocation3 + $0x68] sm:$0xff]
          %v1093 = vld [vmem:[#allocation3 + $0x70] sm:$0xff]
          %v1094 = vld [vmem:[#allocation3 + $0x78] sm:$0xff]
          %v1095 = vld [vmem:[%s298] sm:$0xff]
          %v1096 = vld [vmem:[%s298 + $0x8] sm:$0xff]
          %v1097 = vld [vmem:[%s298 + $0x10] sm:$0xff]
          %v1098 = vld [vmem:[%s298 + $0x18] sm:$0xff]
          %v1099 = vld [vmem:[%s298 + $0x20] sm:$0xff]
          %v1100 = vld [vmem:[%s298 + $0x28] sm:$0xff]
          %v1101 = vld [vmem:[%s298 + $0x30] sm:$0xff]
          %v1102 = vld [vmem:[%s298 + $0x38] sm:$0xff]
          %v1103 = vld [vmem:[%s298 + $0x40] sm:$0xff]
          %v1104 = vld [vmem:[%s298 + $0x48] sm:$0xff]
          %v1105 = vld [vmem:[%s298 + $0x50] sm:$0xff]
          %v1106 = vld [vmem:[%s298 + $0x58] sm:$0xff]
          %v1107 = vld [vmem:[%s298 + $0x60] sm:$0xff]
          %v1108 = vld [vmem:[%s298 + $0x68] sm:$0xff]
          %v1109 = vld [vmem:[%s298 + $0x70] sm:$0xff]
          %v1110 = vld [vmem:[%s298 + $0x78] sm:$0xff]
          %1112 = vset.pattern.permute.xlu0 0
          %1113 = vperm.xlu0 %1112, %v1095
          %v1114 = vpop.permute.xlu0 %1113
          %1117 = vset.pattern.permute.xlu0 0
          %1118 = vperm.xlu0 %1117, %v1096
          %v1119 = vpop.permute.xlu0 %1118
          %1122 = vset.pattern.permute.xlu0 0
          %1123 = vperm.xlu0 %1122, %v1097
          %v1124 = vpop.permute.xlu0 %1123
          %1127 = vset.pattern.permute.xlu0 0
          %1128 = vperm.xlu0 %1127, %v1098
          %v1129 = vpop.permute.xlu0 %1128
          %1132 = vset.pattern.permute.xlu0 0
          %1133 = vperm.xlu0 %1132, %v1099
          %v1134 = vpop.permute.xlu0 %1133
          %1137 = vset.pattern.permute.xlu0 0
          %1138 = vperm.xlu0 %1137, %v1100
          %v1139 = vpop.permute.xlu0 %1138
          %1142 = vset.pattern.permute.xlu0 0
          %1143 = vperm.xlu0 %1142, %v1101
          %v1144 = vpop.permute.xlu0 %1143
          %1147 = vset.pattern.permute.xlu0 0
          %1148 = vperm.xlu0 %1147, %v1102
          %v1149 = vpop.permute.xlu0 %1148
          %1152 = vset.pattern.permute.xlu0 0
          %1153 = vperm.xlu0 %1152, %v1103
          %v1154 = vpop.permute.xlu0 %1153
          %1157 = vset.pattern.permute.xlu0 0
          %1158 = vperm.xlu0 %1157, %v1104
          %v1159 = vpop.permute.xlu0 %1158
          %1162 = vset.pattern.permute.xlu0 0
          %1163 = vperm.xlu0 %1162, %v1105
          %v1164 = vpop.permute.xlu0 %1163
          %1167 = vset.pattern.permute.xlu0 0
          %1168 = vperm.xlu0 %1167, %v1106
          %v1169 = vpop.permute.xlu0 %1168
          %1172 = vset.pattern.permute.xlu0 0
          %1173 = vperm.xlu0 %1172, %v1107
          %v1174 = vpop.permute.xlu0 %1173
          %1177 = vset.pattern.permute.xlu0 0
          %1178 = vperm.xlu0 %1177, %v1108
          %v1179 = vpop.permute.xlu0 %1178
          %1182 = vset.pattern.permute.xlu0 0
          %1183 = vperm.xlu0 %1182, %v1109
          %v1184 = vpop.permute.xlu0 %1183
          %1187 = vset.pattern.permute.xlu0 0
          %1188 = vperm.xlu0 %1187, %v1110
          %v1189 = vpop.permute.xlu0 %1188
          %v1191 = vmul.f32 %v1079, %v1114
          %v1192 = vmul.f32 %v1080, %v1119
          %v1193 = vmul.f32 %v1081, %v1124
          %v1194 = vmul.f32 %v1082, %v1129
          %v1195 = vmul.f32 %v1083, %v1134
          %v1196 = vmul.f32 %v1084, %v1139
          %v1197 = vmul.f32 %v1085, %v1144
          %v1198 = vmul.f32 %v1086, %v1149
          %v1199 = vmul.f32 %v1087, %v1154
          %v1200 = vmul.f32 %v1088, %v1159
          %v1201 = vmul.f32 %v1089, %v1164
          %v1202 = vmul.f32 %v1090, %v1169
          %v1203 = vmul.f32 %v1091, %v1174
          %v1204 = vmul.f32 %v1092, %v1179
          %v1205 = vmul.f32 %v1093, %v1184
          %v1206 = vmul.f32 %v1094, %v1189
          %v1207 = vld [vmem:[%s5] sm:$0x1]
          %v1209 = vlaneseq
          %v1210 = vshrl.u32 %v1209, 7
          %v1211 = vsub.s32 0, %v1210
          %v1212 = vrot.slane %v1207, %v1211
          %v1214 = vadd.f32 %v1191, %v1212
          %v1215 = vadd.f32 %v1192, %v1212
          %v1216 = vadd.f32 %v1193, %v1212
          %v1217 = vadd.f32 %v1194, %v1212
          %v1218 = vadd.f32 %v1195, %v1212
          %v1219 = vadd.f32 %v1196, %v1212
          %v1220 = vadd.f32 %v1197, %v1212
          %v1221 = vadd.f32 %v1198, %v1212
          %v1222 = vadd.f32 %v1199, %v1212
          %v1223 = vadd.f32 %v1200, %v1212
          %v1224 = vadd.f32 %v1201, %v1212
          %v1225 = vadd.f32 %v1202, %v1212
          %v1226 = vadd.f32 %v1203, %v1212
          %v1227 = vadd.f32 %v1204, %v1212
          %v1228 = vadd.f32 %v1205, %v1212
          %v1229 = vadd.f32 %v1206, %v1212
          %1230 = vst [vmem:[%s292] sm:$0xff] %v1214
          %1231 = vst [vmem:[%s292 + $0x8] sm:$0xff] %v1215
          %1232 = vst [vmem:[%s292 + $0x10] sm:$0xff] %v1216
          %1233 = vst [vmem:[%s292 + $0x18] sm:$0xff] %v1217
          %1234 = vst [vmem:[%s292 + $0x20] sm:$0xff] %v1218
          %1235 = vst [vmem:[%s292 + $0x28] sm:$0xff] %v1219
          %1236 = vst [vmem:[%s292 + $0x30] sm:$0xff] %v1220
          %1237 = vst [vmem:[%s292 + $0x38] sm:$0xff] %v1221
          %1238 = vst [vmem:[%s292 + $0x40] sm:$0xff] %v1222
          %1239 = vst [vmem:[%s292 + $0x48] sm:$0xff] %v1223
          %1240 = vst [vmem:[%s292 + $0x50] sm:$0xff] %v1224
          %1241 = vst [vmem:[%s292 + $0x58] sm:$0xff] %v1225
          %1242 = vst [vmem:[%s292 + $0x60] sm:$0xff] %v1226
          %1243 = vst [vmem:[%s292 + $0x68] sm:$0xff] %v1227
          %1244 = vst [vmem:[%s292 + $0x70] sm:$0xff] %v1228
          %1245 = vst [vmem:[%s292 + $0x78] sm:$0xff] %v1229
        $region68: #{tpu_custom_call.1} parent=43 // pred_fallthru
          _
        %s1246 = sand.u32 %s188, 1
        %s1247 = scalar_lea.sflag [#allocation6], %s1246
        %s1248 = sand.u32 %s188, 1
        %s1249 = smul.addr %s1248, 128
        %s1250 = scalar_lea.vmem [#allocation7], %s1249
        // Predicated region
        $region69: #{tpu_custom_call.1} parent=43 // pred_check
          %p1251 = pneg %p198
        $region70: #{tpu_custom_call.1} parent=43 // pred_check_branch
          %1253 = sbr.rel (%p1251) target = $region72
        $region71: #{tpu_custom_call.1} parent=43 // pred_region
          %s1254 = smul.u32 %s27, %s26
          %s1255 = smul.u32 16, %s1254
          %s1257 = ssub.s32 2048, 2048
          %1258 = vsyncadd %s1247, %s1257
          %s1259 = smul.addr %s1255, 128
          %s1260 = scalar_lea.hbm %s6, %s1259
          %s1261 = sshll.u32 %s1250, 4
          %s1262 = int_to_ptr.vmem [resolvable:$true] %s1261
          %1267 = dma.vmem_to_hbm [thread:$0]  %s1262, 2048, %s1260, %s1247, 128, 128, 8
        $region72: #{tpu_custom_call.1} parent=43 // pred_fallthru
          _
      $region44: #{tpu_custom_call.1} parent=5 // pred_fallthru
        _
      %p1268 = scmp.le.s32.totalorder 2, %s16
      // Predicated region
      $region73: #{tpu_custom_call.1} parent=5 // pred_check
        %p1269 = pneg %p1268
      $region74: #{tpu_custom_call.1} parent=5 // pred_check_branch
        %1271 = sbr.rel (%p1269) target = $region76
      $region75: #{tpu_custom_call.1} parent=5 // pred_region
        %s1272 = ssub.s32 %s16, 2
        // Predicated region
        $region77: #{tpu_custom_call.1} parent=75 // pred_check
          %p1273 = pneg %p204
        $region78: #{tpu_custom_call.1} parent=75 // pred_check_branch
          %1275 = sbr.rel (%p1273) target = $region80
        $region79: #{tpu_custom_call.1} parent=75 // pred_region
          %s1276 = sand.u32 %s189, 1
          %s1277 = scalar_lea.sflag [#allocation6], %s1276
          %s1278 = sand.u32 %s189, 1
          %s1279 = smul.addr %s1278, 128
          %s1280 = scalar_lea.vmem [#allocation7], %s1279
          %1281 = dma.done %s1277, 2048
        $region80: #{tpu_custom_call.1} parent=75 // pred_fallthru
          _
      $region76: #{tpu_custom_call.1} parent=5 // pred_fallthru
        _
    $region6: #{tpu_custom_call.1} parent=1 // loop_footer
      %s20 = sadd.s32 1, %s16
    $region7: #{tpu_custom_call.1} parent=1 // loop_footer_branch
      %15 = sbr.rel target = $region3
    $region8: #{tpu_custom_call.1} parent=1 // loop_exit
      _
    %1282 = vsyncpa [#allocation5], 1
    %s1283 = scalar_lea.sflag [#allocation5], 1
    %1284 = vsyncpa %s1283, 1
    %1285 = vsyncpa [#allocation6], 1
    %s1286 = scalar_lea.sflag [#allocation6], 1
    %1287 = vsyncpa %s1286, 1

</llo_original>
